<compile_context>
chip_gen: v5e
topology: v5e:2x2
jax: 0.10.0
libtpu: 0.0.40
codegen_flags: <defaults>
</compile_context>

<pallas_src>
import jax
import jax.numpy as jnp
from jax import lax
from jax.experimental import pallas as pl
from jax.experimental.pallas import tpu as pltpu

# ----------------------- model hyper-parameters (small) -----------------------
VOCAB = 128     # vocab size (exactly one 128-lane tile)
W_DIM = 32      # embedding dim (== h_dim, required by weight tying)
H_DIM = 32      # LSTM hidden dim (4H = 128 lanes)
NUM_LAYERS = 2
BATCH = 2
SEQ = 9         # sentence length; model consumes SEQ-1 = 8 steps


# ------------------------------ fused Pallas kernel ----------------------------
def rnnlm_kernel(tok_ref, w_ref, b_ref, out_ref):
    """Whole RNNLM forward for one batch of sentences.

    tok_ref : (N, 2) int32   t-major flattened [input, target] tokens, N=(T-1)*B
    w_ref   : (V+4H, 4H) f32 packed weights:
                rows [0,     V    ) : emb @ Wih0^T + b0   (g cols pre-scaled x2)
                rows [V,     V+H  ) : Whh0^T              (g cols pre-scaled x2)
                rows [V+H,   V+2H ) : Wih1^T              (g cols pre-scaled x2)
                rows [V+2H,  V+3H ) : Whh1^T              (g cols pre-scaled x2)
                rows [V+3H,  V+4H ) : emb^T (tied output projection)
    b_ref   : (2, 4H) f32    row 0: b1 (g cols pre-scaled x2), row 1: out bias
    out_ref : (1, B) f32     per-sentence summed target log-likelihood
    PyTorch gate order: i, f, g, o.
    """
    N = tok_ref.shape[0]
    V = w_ref.shape[1]
    H = V // 4
    B = out_ref.shape[1]
    T = N // B

    # ---- static, 8-aligned views into the packed slabs (no per-call DMAs) ----
    w0 = w_ref[0:V, :]                       # (V, 4H)  fused emb->gates (+b0)
    whh0 = w_ref[V:V + H, :]                 # (H, 4H)
    wih1 = w_ref[V + H:V + 2 * H, :]         # (H, 4H)
    whh1 = w_ref[V + 2 * H:V + 3 * H, :]     # (H, 4H)
    emb_t = w_ref[V + 3 * H:V + 4 * H, :]    # (W, V)
    b1 = b_ref[0:1, :]                       # (1, 4H)
    out_b = b_ref[1:2, :]                    # (1, V)

    inp = tok_ref[:, 0:1]                    # (N, 1)
    tgt = tok_ref[:, 1:2]                    # (N, 1)

    # ---- embedding + layer-0 input projection as ONE one-hot MXU matmul ----
    col_v = lax.broadcasted_iota(jnp.int32, (N, V), 1)                # (N, V)
    onehot = (col_v == inp).astype(jnp.float32)                       # (N, V)
    gates_x0 = jnp.dot(onehot, w0, preferred_element_type=jnp.float32)  # (N,4H)

    def cell(g, c):
        # g-gate lanes of `g` carry 2*g_pre (weights pre-scaled offline), so
        # one sigmoid pass over the whole (B,4H) vreg yields all four gates:
        # tanh(g_pre) = 2*sigmoid(2*g_pre) - 1.
        s = jax.nn.sigmoid(g)                                         # EUP pass 1
        i = s[:, 0:H]
        f = s[:, H:2 * H]
        gg = 2.0 * s[:, 2 * H:3 * H] - 1.0
        o = s[:, 3 * H:4 * H]
        c_new = f * c + i * gg
        h_new = o * jnp.tanh(c_new)                                   # EUP pass 2
        return h_new, c_new

    zeros = jnp.zeros((B, H), jnp.float32)
    h0, c0 = zeros, zeros
    h1, c1 = zeros, zeros
    gx1 = None                  # layer-1 input projection from previous h0
    h1_steps = []

    # ---- software-pipelined recurrence: layer-0 step t || layer-1 step t-1 ----
    for t in range(T):                                                # unrolled
        g0 = gates_x0[t * B:(t + 1) * B, :] + jnp.dot(
            h0, whh0, preferred_element_type=jnp.float32)             # (B, 4H)
        if t > 0:
            g1 = gx1 + jnp.dot(h1, whh1,
                               preferred_element_type=jnp.float32)    # (B, 4H)
            h1, c1 = cell(g1, c1)
            h1_steps.append(h1)
        h0, c0 = cell(g0, c0)
        gx1 = jnp.dot(h0, wih1, preferred_element_type=jnp.float32) + b1
    # drain: layer-1 step T-1
    g1 = gx1 + jnp.dot(h1, whh1, preferred_element_type=jnp.float32)
    h1, c1 = cell(g1, c1)
    h1_steps.append(h1)

    h1_all = jnp.concatenate(h1_steps, axis=0)                        # (N, H)

    # ---- tied-weight projection + log-softmax target log-likelihood ----
    logits = jnp.dot(h1_all, emb_t,
                     preferred_element_type=jnp.float32) + out_b      # (N, V)
    m = jnp.max(logits, axis=-1, keepdims=True)
    lse = m + jnp.log(jnp.sum(jnp.exp(logits - m), axis=-1, keepdims=True))
    sel = jnp.sum(jnp.where(col_v == tgt, logits, 0.0),
                  axis=-1, keepdims=True)                             # (N, 1)
    ll = sel - lse                                                    # (N, 1)

    # ---- per-sentence sum over time, lane-dense (1, B) output ----
    row_b = lax.broadcasted_iota(jnp.int32, (N, B), 0) % B            # n -> b
    col_b = lax.broadcasted_iota(jnp.int32, (N, B), 1)
    bmask = (row_b == col_b).astype(jnp.float32)                      # (N, B)
    out_ref[...] = jnp.sum(ll * bmask, axis=0, keepdims=True)         # (1, B)


# ------------------------------- wrappers ---------------------------------------
def prepare_params(raw):
    """One-time param massaging: fold, transpose, pre-scale, pack into slabs."""
    H = H_DIM
    g_lo, g_hi = 2 * H, 3 * H

    def scale_g(w):  # pre-scale g-gate columns by 2 (tanh-via-sigmoid trick)
        return w.at[..., g_lo:g_hi].multiply(2.0)

    emb = raw["emb"]
    # Fold embedding table and combined layer-0 bias into one (V, 4H) weight.
    w0 = scale_g(emb @ raw["w_ih_t_0"] + raw["b_0"][None, :])
    whh0 = scale_g(raw["w_hh_t_0"])
    wih1 = scale_g(raw["w_ih_t_1"])
    whh1 = scale_g(raw["w_hh_t_1"])
    b1 = scale_g(raw["b_1"][None, :])
    emb_t = emb.T                                        # (W, V) tied projection
    out_b = raw["out_b"][None, :]                        # (1, V)

    w_slab = jnp.concatenate([w0, whh0, wih1, whh1, emb_t], axis=0)  # (256, 128)
    b_slab = jnp.concatenate([b1, out_b], axis=0)                    # (2, 128)
    return {"w": jnp.asarray(w_slab, jnp.float32),
            "b": jnp.asarray(b_slab, jnp.float32)}


@jax.jit
def rnnlm_forward(prepped, sent):
    """sent: (B, T) int32. Returns (B,) sum of target log-likelihoods."""
    B, T = sent.shape
    N = B * (T - 1)

    # t-major flattening so rows are ordered (t, b); pack [input, target].
    inp_tm = sent[:, :-1].T.reshape(N, 1)
    tgt_tm = sent[:, 1:].T.reshape(N, 1)
    tok = jnp.concatenate([inp_tm, tgt_tm], axis=1).astype(jnp.int32)  # (N, 2)

    vmem = pl.BlockSpec(memory_space=pltpu.MemorySpace.VMEM)
    out = pl.pallas_call(
        rnnlm_kernel,
        out_shape=jax.ShapeDtypeStruct((1, B), jnp.float32),
        in_specs=[vmem, vmem, vmem],
        out_specs=vmem,
    )(tok, prepped["w"], prepped["b"])
    return out.reshape(B)


# --------------------------- pure-JAX reference --------------------------------
def rnnlm_reference(params, sent):
    B, T = sent.shape
    inp, tgt = sent[:, :-1], sent[:, 1:]
    emb = jnp.take(params["emb"], inp, axis=0).astype(jnp.float32)

    def lstm_layer(x, w_ih_t, w_hh_t, b):
        Bx = x.shape[0]
        H = w_hh_t.shape[0]

        def step(carry, x_t):
            h, c = carry
            gates = x_t @ w_ih_t + h @ w_hh_t + b
            i = jax.nn.sigmoid(gates[:, 0 * H:1 * H])
            f = jax.nn.sigmoid(gates[:, 1 * H:2 * H])
            g = jnp.tanh(gates[:, 2 * H:3 * H])
            o = jax.nn.sigmoid(gates[:, 3 * H:4 * H])
            c = f * c + i * g
            h = o * jnp.tanh(c)
            return (h, c), h

        init = (jnp.zeros((Bx, H)), jnp.zeros((Bx, H)))
        _, hs = lax.scan(step, init, jnp.transpose(x, (1, 0, 2)))
        return jnp.transpose(hs, (1, 0, 2))

    x = emb
    for l in range(NUM_LAYERS):
        x = lstm_layer(x, params[f"w_ih_t_{l}"], params[f"w_hh_t_{l}"],
                       params[f"b_{l}"])
    logits = x @ params["emb"].T + params["out_b"]
    log_prob = jax.nn.log_softmax(logits, axis=2)
    ll = jnp.take_along_axis(log_prob, tgt[:, :, None], axis=2)[:, :, 0]
    return ll.sum(axis=1)


# ---------------------------------- main ----------------------------------------
def init_params(key):
    ks = jax.random.split(key, 2 + 4 * NUM_LAYERS)
    scale = 1.0 / jnp.sqrt(H_DIM)
    params = {}
    params["emb"] = jax.random.uniform(
        ks[0], (VOCAB, W_DIM), jnp.float32, -scale, scale)
    params["out_b"] = jax.random.uniform(
        ks[1], (VOCAB,), jnp.float32, -scale, scale)
    ki = 2
    for l in range(NUM_LAYERS):
        din = W_DIM if l == 0 else H_DIM
        w_ih = jax.random.uniform(ks[ki + 0], (4 * H_DIM, din),
                                  jnp.float32, -scale, scale)
        w_hh = jax.random.uniform(ks[ki + 1], (4 * H_DIM, H_DIM),
                                  jnp.float32, -scale, scale)
        b_ih = jax.random.uniform(ks[ki + 2], (4 * H_DIM,),
                                  jnp.float32, -scale, scale)
        b_hh = jax.random.uniform(ks[ki + 3], (4 * H_DIM,),
                                  jnp.float32, -scale, scale)
        params[f"w_ih_t_{l}"] = w_ih.T          # (Din, 4H)
        params[f"w_hh_t_{l}"] = w_hh.T          # (H, 4H)
        params[f"b_{l}"] = b_ih + b_hh          # (4H,)
        ki += 4
    return params


if __name__ == "__main__":
    key = jax.random.PRNGKey(0)
    pkey, skey = jax.random.split(key)
    raw_params = init_params(pkey)
    prepped = prepare_params(raw_params)     # one-time packing / folding

    sent = jax.random.randint(skey, (BATCH, SEQ), 0, VOCAB, dtype=jnp.int32)

    out = jax.block_until_ready(rnnlm_forward(prepped, sent))
    ref = jax.block_until_ready(rnnlm_reference(raw_params, sent))

    assert out.shape == (BATCH,)
    assert jnp.allclose(out, ref, rtol=1e-3, atol=1e-3), (out, ref)
    print("KERNEL_OK")
</pallas_src>

<mosaic_0001>
module attributes {stable_mosaic.version = 11 : i64} {
  func.func @rnnlm_kernel(%arg0: memref<16x2xi32, #tpu.memory_space<vmem>>, %arg1: memref<256x128xf32, #tpu.memory_space<vmem>>, %arg2: memref<2x128xf32, #tpu.memory_space<vmem>>, %arg3: memref<1x2xf32, #tpu.memory_space<vmem>>) attributes {dimension_semantics = [], scalar_prefetch = 0 : i64, scratch_operands = 0 : i64, tpu.core_type = #tpu.core_type<tc>} {
    %c0 = arith.constant 0 : index
    %c0_0 = arith.constant 0 : index
    %0 = vector.load %arg1[%c0, %c0_0] : memref<256x128xf32, #tpu.memory_space<vmem>>, vector<128x128xf32>
    %c128 = arith.constant 128 : index
    %c0_1 = arith.constant 0 : index
    %1 = vector.load %arg1[%c128, %c0_1] : memref<256x128xf32, #tpu.memory_space<vmem>>, vector<32x128xf32>
    %c160 = arith.constant 160 : index
    %c0_2 = arith.constant 0 : index
    %2 = vector.load %arg1[%c160, %c0_2] : memref<256x128xf32, #tpu.memory_space<vmem>>, vector<32x128xf32>
    %c192 = arith.constant 192 : index
    %c0_3 = arith.constant 0 : index
    %3 = vector.load %arg1[%c192, %c0_3] : memref<256x128xf32, #tpu.memory_space<vmem>>, vector<32x128xf32>
    %c224 = arith.constant 224 : index
    %c0_4 = arith.constant 0 : index
    %4 = vector.load %arg1[%c224, %c0_4] : memref<256x128xf32, #tpu.memory_space<vmem>>, vector<32x128xf32>
    %c0_5 = arith.constant 0 : index
    %c0_6 = arith.constant 0 : index
    %5 = vector.load %arg2[%c0_5, %c0_6] : memref<2x128xf32, #tpu.memory_space<vmem>>, vector<1x128xf32>
    %c1 = arith.constant 1 : index
    %c0_7 = arith.constant 0 : index
    %6 = vector.load %arg2[%c1, %c0_7] : memref<2x128xf32, #tpu.memory_space<vmem>>, vector<1x128xf32>
    %c0_8 = arith.constant 0 : index
    %c0_9 = arith.constant 0 : index
    %7 = vector.load %arg0[%c0_8, %c0_9] : memref<16x2xi32, #tpu.memory_space<vmem>>, vector<16x1xi32>
    %c0_10 = arith.constant 0 : index
    %c1_11 = arith.constant 1 : index
    %8 = vector.load %arg0[%c0_10, %c1_11] : memref<16x2xi32, #tpu.memory_space<vmem>>, vector<16x1xi32>
    %9 = tpu.iota {dimensions = array<i32: 1>} : vector<16x128xi32>
    %10 = vector.broadcast %7 : vector<16x1xi32> to vector<16x128xi32>
    %11 = arith.cmpi eq, %9, %10 : vector<16x128xi32>
    %12 = arith.extui %11 : vector<16x128xi1> to vector<16x128xi32>
    %13 = arith.sitofp %12 : vector<16x128xi32> to vector<16x128xf32>
    %cst = arith.constant dense<0.000000e+00> : vector<16x128xf32>
    %14 = tpu.matmul %13, %0, %cst {dimension_numbers = #tpu.dot_dimension_numbers<[1], [0], [0], [1], [0, 0, 1, 1], [], []>} : vector<16x128xf32>, vector<128x128xf32>, vector<16x128xf32> -> vector<16x128xf32>
    %cst_12 = arith.constant 0.000000e+00 : f32
    %15 = vector.broadcast %cst_12 : f32 to vector<2x32xf32>
    %16 = vector.extract_strided_slice %14 {offsets = [0, 0], sizes = [2, 128], strides = [1, 1]} : vector<16x128xf32> to vector<2x128xf32>
    %cst_13 = arith.constant dense<0.000000e+00> : vector<2x128xf32>
    %17 = tpu.matmul %15, %1, %cst_13 {dimension_numbers = #tpu.dot_dimension_numbers<[1], [0], [0], [1], [0, 0, 1, 1], [], []>} : vector<2x32xf32>, vector<32x128xf32>, vector<2x128xf32> -> vector<2x128xf32>
    %18 = arith.addf %16, %17 : vector<2x128xf32>
    %19 = arith.negf %18 : vector<2x128xf32>
    %20 = math.exp %19 : vector<2x128xf32>
    %cst_14 = arith.constant 1.000000e+00 : f32
    %21 = vector.broadcast %cst_14 : f32 to vector<2x128xf32>
    %22 = arith.addf %21, %20 : vector<2x128xf32>
    %23 = arith.divf %21, %22 : vector<2x128xf32>
    %24 = vector.extract_strided_slice %23 {offsets = [0, 0], sizes = [2, 32], strides = [1, 1]} : vector<2x128xf32> to vector<2x32xf32>
    %25 = vector.extract_strided_slice %23 {offsets = [0, 32], sizes = [2, 32], strides = [1, 1]} : vector<2x128xf32> to vector<2x32xf32>
    %26 = vector.extract_strided_slice %23 {offsets = [0, 64], sizes = [2, 32], strides = [1, 1]} : vector<2x128xf32> to vector<2x32xf32>
    %cst_15 = arith.constant 2.000000e+00 : f32
    %27 = vector.broadcast %cst_15 : f32 to vector<2x32xf32>
    %28 = arith.mulf %27, %26 : vector<2x32xf32>
    %cst_16 = arith.constant 1.000000e+00 : f32
    %29 = vector.broadcast %cst_16 : f32 to vector<2x32xf32>
    %30 = arith.subf %28, %29 : vector<2x32xf32>
    %31 = vector.extract_strided_slice %23 {offsets = [0, 96], sizes = [2, 32], strides = [1, 1]} : vector<2x128xf32> to vector<2x32xf32>
    %32 = arith.mulf %25, %15 : vector<2x32xf32>
    %33 = arith.mulf %24, %30 : vector<2x32xf32>
    %34 = arith.addf %32, %33 : vector<2x32xf32>
    %35 = math.tanh %34 : vector<2x32xf32>
    %36 = arith.mulf %31, %35 : vector<2x32xf32>
    %cst_17 = arith.constant dense<0.000000e+00> : vector<2x128xf32>
    %37 = tpu.matmul %36, %2, %cst_17 {dimension_numbers = #tpu.dot_dimension_numbers<[1], [0], [0], [1], [0, 0, 1, 1], [], []>} : vector<2x32xf32>, vector<32x128xf32>, vector<2x128xf32> -> vector<2x128xf32>
    %38 = vector.broadcast %5 : vector<1x128xf32> to vector<2x128xf32>
    %39 = arith.addf %37, %38 : vector<2x128xf32>
    %40 = vector.extract_strided_slice %14 {offsets = [2, 0], sizes = [2, 128], strides = [1, 1]} : vector<16x128xf32> to vector<2x128xf32>
    %cst_18 = arith.constant dense<0.000000e+00> : vector<2x128xf32>
    %41 = tpu.matmul %36, %1, %cst_18 {dimension_numbers = #tpu.dot_dimension_numbers<[1], [0], [0], [1], [0, 0, 1, 1], [], []>} : vector<2x32xf32>, vector<32x128xf32>, vector<2x128xf32> -> vector<2x128xf32>
    %42 = arith.addf %40, %41 : vector<2x128xf32>
    %cst_19 = arith.constant dense<0.000000e+00> : vector<2x128xf32>
    %43 = tpu.matmul %15, %3, %cst_19 {dimension_numbers = #tpu.dot_dimension_numbers<[1], [0], [0], [1], [0, 0, 1, 1], [], []>} : vector<2x32xf32>, vector<32x128xf32>, vector<2x128xf32> -> vector<2x128xf32>
    %44 = arith.addf %39, %43 : vector<2x128xf32>
    %45 = arith.negf %44 : vector<2x128xf32>
    %46 = math.exp %45 : vector<2x128xf32>
    %cst_20 = arith.constant 1.000000e+00 : f32
    %47 = vector.broadcast %cst_20 : f32 to vector<2x128xf32>
    %48 = arith.addf %47, %46 : vector<2x128xf32>
    %49 = arith.divf %47, %48 : vector<2x128xf32>
    %50 = vector.extract_strided_slice %49 {offsets = [0, 0], sizes = [2, 32], strides = [1, 1]} : vector<2x128xf32> to vector<2x32xf32>
    %51 = vector.extract_strided_slice %49 {offsets = [0, 32], sizes = [2, 32], strides = [1, 1]} : vector<2x128xf32> to vector<2x32xf32>
    %52 = vector.extract_strided_slice %49 {offsets = [0, 64], sizes = [2, 32], strides = [1, 1]} : vector<2x128xf32> to vector<2x32xf32>
    %cst_21 = arith.constant 2.000000e+00 : f32
    %53 = vector.broadcast %cst_21 : f32 to vector<2x32xf32>
    %54 = arith.mulf %53, %52 : vector<2x32xf32>
    %cst_22 = arith.constant 1.000000e+00 : f32
    %55 = vector.broadcast %cst_22 : f32 to vector<2x32xf32>
    %56 = arith.subf %54, %55 : vector<2x32xf32>
    %57 = vector.extract_strided_slice %49 {offsets = [0, 96], sizes = [2, 32], strides = [1, 1]} : vector<2x128xf32> to vector<2x32xf32>
    %58 = arith.mulf %51, %15 : vector<2x32xf32>
    %59 = arith.mulf %50, %56 : vector<2x32xf32>
    %60 = arith.addf %58, %59 : vector<2x32xf32>
    %61 = math.tanh %60 : vector<2x32xf32>
    %62 = arith.mulf %57, %61 : vector<2x32xf32>
    %63 = arith.negf %42 : vector<2x128xf32>
    %64 = math.exp %63 : vector<2x128xf32>
    %cst_23 = arith.constant 1.000000e+00 : f32
    %65 = vector.broadcast %cst_23 : f32 to vector<2x128xf32>
    %66 = arith.addf %65, %64 : vector<2x128xf32>
    %67 = arith.divf %65, %66 : vector<2x128xf32>
    %68 = vector.extract_strided_slice %67 {offsets = [0, 0], sizes = [2, 32], strides = [1, 1]} : vector<2x128xf32> to vector<2x32xf32>
    %69 = vector.extract_strided_slice %67 {offsets = [0, 32], sizes = [2, 32], strides = [1, 1]} : vector<2x128xf32> to vector<2x32xf32>
    %70 = vector.extract_strided_slice %67 {offsets = [0, 64], sizes = [2, 32], strides = [1, 1]} : vector<2x128xf32> to vector<2x32xf32>
    %cst_24 = arith.constant 2.000000e+00 : f32
    %71 = vector.broadcast %cst_24 : f32 to vector<2x32xf32>
    %72 = arith.mulf %71, %70 : vector<2x32xf32>
    %cst_25 = arith.constant 1.000000e+00 : f32
    %73 = vector.broadcast %cst_25 : f32 to vector<2x32xf32>
    %74 = arith.subf %72, %73 : vector<2x32xf32>
    %75 = vector.extract_strided_slice %67 {offsets = [0, 96], sizes = [2, 32], strides = [1, 1]} : vector<2x128xf32> to vector<2x32xf32>
    %76 = arith.mulf %69, %34 : vector<2x32xf32>
    %77 = arith.mulf %68, %74 : vector<2x32xf32>
    %78 = arith.addf %76, %77 : vector<2x32xf32>
    %79 = math.tanh %78 : vector<2x32xf32>
    %80 = arith.mulf %75, %79 : vector<2x32xf32>
    %cst_26 = arith.constant dense<0.000000e+00> : vector<2x128xf32>
    %81 = tpu.matmul %80, %2, %cst_26 {dimension_numbers = #tpu.dot_dimension_numbers<[1], [0], [0], [1], [0, 0, 1, 1], [], []>} : vector<2x32xf32>, vector<32x128xf32>, vector<2x128xf32> -> vector<2x128xf32>
    %82 = vector.broadcast %5 : vector<1x128xf32> to vector<2x128xf32>
    %83 = arith.addf %81, %82 : vector<2x128xf32>
    %84 = vector.extract_strided_slice %14 {offsets = [4, 0], sizes = [2, 128], strides = [1, 1]} : vector<16x128xf32> to vector<2x128xf32>
    %cst_27 = arith.constant dense<0.000000e+00> : vector<2x128xf32>
    %85 = tpu.matmul %80, %1, %cst_27 {dimension_numbers = #tpu.dot_dimension_numbers<[1], [0], [0], [1], [0, 0, 1, 1], [], []>} : vector<2x32xf32>, vector<32x128xf32>, vector<2x128xf32> -> vector<2x128xf32>
    %86 = arith.addf %84, %85 : vector<2x128xf32>
    %cst_28 = arith.constant dense<0.000000e+00> : vector<2x128xf32>
    %87 = tpu.matmul %62, %3, %cst_28 {dimension_numbers = #tpu.dot_dimension_numbers<[1], [0], [0], [1], [0, 0, 1, 1], [], []>} : vector<2x32xf32>, vector<32x128xf32>, vector<2x128xf32> -> vector<2x128xf32>
    %88 = arith.addf %83, %87 : vector<2x128xf32>
    %89 = arith.negf %88 : vector<2x128xf32>
    %90 = math.exp %89 : vector<2x128xf32>
    %cst_29 = arith.constant 1.000000e+00 : f32
    %91 = vector.broadcast %cst_29 : f32 to vector<2x128xf32>
    %92 = arith.addf %91, %90 : vector<2x128xf32>
    %93 = arith.divf %91, %92 : vector<2x128xf32>
    %94 = vector.extract_strided_slice %93 {offsets = [0, 0], sizes = [2, 32], strides = [1, 1]} : vector<2x128xf32> to vector<2x32xf32>
    %95 = vector.extract_strided_slice %93 {offsets = [0, 32], sizes = [2, 32], strides = [1, 1]} : vector<2x128xf32> to vector<2x32xf32>
    %96 = vector.extract_strided_slice %93 {offsets = [0, 64], sizes = [2, 32], strides = [1, 1]} : vector<2x128xf32> to vector<2x32xf32>
    %cst_30 = arith.constant 2.000000e+00 : f32
    %97 = vector.broadcast %cst_30 : f32 to vector<2x32xf32>
    %98 = arith.mulf %97, %96 : vector<2x32xf32>
    %cst_31 = arith.constant 1.000000e+00 : f32
    %99 = vector.broadcast %cst_31 : f32 to vector<2x32xf32>
    %100 = arith.subf %98, %99 : vector<2x32xf32>
    %101 = vector.extract_strided_slice %93 {offsets = [0, 96], sizes = [2, 32], strides = [1, 1]} : vector<2x128xf32> to vector<2x32xf32>
    %102 = arith.mulf %95, %60 : vector<2x32xf32>
    %103 = arith.mulf %94, %100 : vector<2x32xf32>
    %104 = arith.addf %102, %103 : vector<2x32xf32>
    %105 = math.tanh %104 : vector<2x32xf32>
    %106 = arith.mulf %101, %105 : vector<2x32xf32>
    %107 = arith.negf %86 : vector<2x128xf32>
    %108 = math.exp %107 : vector<2x128xf32>
    %cst_32 = arith.constant 1.000000e+00 : f32
    %109 = vector.broadcast %cst_32 : f32 to vector<2x128xf32>
    %110 = arith.addf %109, %108 : vector<2x128xf32>
    %111 = arith.divf %109, %110 : vector<2x128xf32>
    %112 = vector.extract_strided_slice %111 {offsets = [0, 0], sizes = [2, 32], strides = [1, 1]} : vector<2x128xf32> to vector<2x32xf32>
    %113 = vector.extract_strided_slice %111 {offsets = [0, 32], sizes = [2, 32], strides = [1, 1]} : vector<2x128xf32> to vector<2x32xf32>
    %114 = vector.extract_strided_slice %111 {offsets = [0, 64], sizes = [2, 32], strides = [1, 1]} : vector<2x128xf32> to vector<2x32xf32>
    %cst_33 = arith.constant 2.000000e+00 : f32
    %115 = vector.broadcast %cst_33 : f32 to vector<2x32xf32>
    %116 = arith.mulf %115, %114 : vector<2x32xf32>
    %cst_34 = arith.constant 1.000000e+00 : f32
    %117 = vector.broadcast %cst_34 : f32 to vector<2x32xf32>
    %118 = arith.subf %116, %117 : vector<2x32xf32>
    %119 = vector.extract_strided_slice %111 {offsets = [0, 96], sizes = [2, 32], strides = [1, 1]} : vector<2x128xf32> to vector<2x32xf32>
    %120 = arith.mulf %113, %78 : vector<2x32xf32>
    %121 = arith.mulf %112, %118 : vector<2x32xf32>
    %122 = arith.addf %120, %121 : vector<2x32xf32>
    %123 = math.tanh %122 : vector<2x32xf32>
    %124 = arith.mulf %119, %123 : vector<2x32xf32>
    %cst_35 = arith.constant dense<0.000000e+00> : vector<2x128xf32>
    %125 = tpu.matmul %124, %2, %cst_35 {dimension_numbers = #tpu.dot_dimension_numbers<[1], [0], [0], [1], [0, 0, 1, 1], [], []>} : vector<2x32xf32>, vector<32x128xf32>, vector<2x128xf32> -> vector<2x128xf32>
    %126 = vector.broadcast %5 : vector<1x128xf32> to vector<2x128xf32>
    %127 = arith.addf %125, %126 : vector<2x128xf32>
    %128 = vector.extract_strided_slice %14 {offsets = [6, 0], sizes = [2, 128], strides = [1, 1]} : vector<16x128xf32> to vector<2x128xf32>
    %cst_36 = arith.constant dense<0.000000e+00> : vector<2x128xf32>
    %129 = tpu.matmul %124, %1, %cst_36 {dimension_numbers = #tpu.dot_dimension_numbers<[1], [0], [0], [1], [0, 0, 1, 1], [], []>} : vector<2x32xf32>, vector<32x128xf32>, vector<2x128xf32> -> vector<2x128xf32>
    %130 = arith.addf %128, %129 : vector<2x128xf32>
    %cst_37 = arith.constant dense<0.000000e+00> : vector<2x128xf32>
    %131 = tpu.matmul %106, %3, %cst_37 {dimension_numbers = #tpu.dot_dimension_numbers<[1], [0], [0], [1], [0, 0, 1, 1], [], []>} : vector<2x32xf32>, vector<32x128xf32>, vector<2x128xf32> -> vector<2x128xf32>
    %132 = arith.addf %127, %131 : vector<2x128xf32>
    %133 = arith.negf %132 : vector<2x128xf32>
    %134 = math.exp %133 : vector<2x128xf32>
    %cst_38 = arith.constant 1.000000e+00 : f32
    %135 = vector.broadcast %cst_38 : f32 to vector<2x128xf32>
    %136 = arith.addf %135, %134 : vector<2x128xf32>
    %137 = arith.divf %135, %136 : vector<2x128xf32>
    %138 = vector.extract_strided_slice %137 {offsets = [0, 0], sizes = [2, 32], strides = [1, 1]} : vector<2x128xf32> to vector<2x32xf32>
    %139 = vector.extract_strided_slice %137 {offsets = [0, 32], sizes = [2, 32], strides = [1, 1]} : vector<2x128xf32> to vector<2x32xf32>
    %140 = vector.extract_strided_slice %137 {offsets = [0, 64], sizes = [2, 32], strides = [1, 1]} : vector<2x128xf32> to vector<2x32xf32>
    %cst_39 = arith.constant 2.000000e+00 : f32
    %141 = vector.broadcast %cst_39 : f32 to vector<2x32xf32>
    %142 = arith.mulf %141, %140 : vector<2x32xf32>
    %cst_40 = arith.constant 1.000000e+00 : f32
    %143 = vector.broadcast %cst_40 : f32 to vector<2x32xf32>
    %144 = arith.subf %142, %143 : vector<2x32xf32>
    %145 = vector.extract_strided_slice %137 {offsets = [0, 96], sizes = [2, 32], strides = [1, 1]} : vector<2x128xf32> to vector<2x32xf32>
    %146 = arith.mulf %139, %104 : vector<2x32xf32>
    %147 = arith.mulf %138, %144 : vector<2x32xf32>
    %148 = arith.addf %146, %147 : vector<2x32xf32>
    %149 = math.tanh %148 : vector<2x32xf32>
    %150 = arith.mulf %145, %149 : vector<2x32xf32>
    %151 = arith.negf %130 : vector<2x128xf32>
    %152 = math.exp %151 : vector<2x128xf32>
    %cst_41 = arith.constant 1.000000e+00 : f32
    %153 = vector.broadcast %cst_41 : f32 to vector<2x128xf32>
    %154 = arith.addf %153, %152 : vector<2x128xf32>
    %155 = arith.divf %153, %154 : vector<2x128xf32>
    %156 = vector.extract_strided_slice %155 {offsets = [0, 0], sizes = [2, 32], strides = [1, 1]} : vector<2x128xf32> to vector<2x32xf32>
    %157 = vector.extract_strided_slice %155 {offsets = [0, 32], sizes = [2, 32], strides = [1, 1]} : vector<2x128xf32> to vector<2x32xf32>
    %158 = vector.extract_strided_slice %155 {offsets = [0, 64], sizes = [2, 32], strides = [1, 1]} : vector<2x128xf32> to vector<2x32xf32>
    %cst_42 = arith.constant 2.000000e+00 : f32
    %159 = vector.broadcast %cst_42 : f32 to vector<2x32xf32>
    %160 = arith.mulf %159, %158 : vector<2x32xf32>
    %cst_43 = arith.constant 1.000000e+00 : f32
    %161 = vector.broadcast %cst_43 : f32 to vector<2x32xf32>
    %162 = arith.subf %160, %161 : vector<2x32xf32>
    %163 = vector.extract_strided_slice %155 {offsets = [0, 96], sizes = [2, 32], strides = [1, 1]} : vector<2x128xf32> to vector<2x32xf32>
    %164 = arith.mulf %157, %122 : vector<2x32xf32>
    %165 = arith.mulf %156, %162 : vector<2x32xf32>
    %166 = arith.addf %164, %165 : vector<2x32xf32>
    %167 = math.tanh %166 : vector<2x32xf32>
    %168 = arith.mulf %163, %167 : vector<2x32xf32>
    %cst_44 = arith.constant dense<0.000000e+00> : vector<2x128xf32>
    %169 = tpu.matmul %168, %2, %cst_44 {dimension_numbers = #tpu.dot_dimension_numbers<[1], [0], [0], [1], [0, 0, 1, 1], [], []>} : vector<2x32xf32>, vector<32x128xf32>, vector<2x128xf32> -> vector<2x128xf32>
    %170 = vector.broadcast %5 : vector<1x128xf32> to vector<2x128xf32>
    %171 = arith.addf %169, %170 : vector<2x128xf32>
    %172 = vector.extract_strided_slice %14 {offsets = [8, 0], sizes = [2, 128], strides = [1, 1]} : vector<16x128xf32> to vector<2x128xf32>
    %cst_45 = arith.constant dense<0.000000e+00> : vector<2x128xf32>
    %173 = tpu.matmul %168, %1, %cst_45 {dimension_numbers = #tpu.dot_dimension_numbers<[1], [0], [0], [1], [0, 0, 1, 1], [], []>} : vector<2x32xf32>, vector<32x128xf32>, vector<2x128xf32> -> vector<2x128xf32>
    %174 = arith.addf %172, %173 : vector<2x128xf32>
    %cst_46 = arith.constant dense<0.000000e+00> : vector<2x128xf32>
    %175 = tpu.matmul %150, %3, %cst_46 {dimension_numbers = #tpu.dot_dimension_numbers<[1], [0], [0], [1], [0, 0, 1, 1], [], []>} : vector<2x32xf32>, vector<32x128xf32>, vector<2x128xf32> -> vector<2x128xf32>
    %176 = arith.addf %171, %175 : vector<2x128xf32>
    %177 = arith.negf %176 : vector<2x128xf32>
    %178 = math.exp %177 : vector<2x128xf32>
    %cst_47 = arith.constant 1.000000e+00 : f32
    %179 = vector.broadcast %cst_47 : f32 to vector<2x128xf32>
    %180 = arith.addf %179, %178 : vector<2x128xf32>
    %181 = arith.divf %179, %180 : vector<2x128xf32>
    %182 = vector.extract_strided_slice %181 {offsets = [0, 0], sizes = [2, 32], strides = [1, 1]} : vector<2x128xf32> to vector<2x32xf32>
    %183 = vector.extract_strided_slice %181 {offsets = [0, 32], sizes = [2, 32], strides = [1, 1]} : vector<2x128xf32> to vector<2x32xf32>
    %184 = vector.extract_strided_slice %181 {offsets = [0, 64], sizes = [2, 32], strides = [1, 1]} : vector<2x128xf32> to vector<2x32xf32>
    %cst_48 = arith.constant 2.000000e+00 : f32
    %185 = vector.broadcast %cst_48 : f32 to vector<2x32xf32>
    %186 = arith.mulf %185, %184 : vector<2x32xf32>
    %cst_49 = arith.constant 1.000000e+00 : f32
    %187 = vector.broadcast %cst_49 : f32 to vector<2x32xf32>
    %188 = arith.subf %186, %187 : vector<2x32xf32>
    %189 = vector.extract_strided_slice %181 {offsets = [0, 96], sizes = [2, 32], strides = [1, 1]} : vector<2x128xf32> to vector<2x32xf32>
    %190 = arith.mulf %183, %148 : vector<2x32xf32>
    %191 = arith.mulf %182, %188 : vector<2x32xf32>
    %192 = arith.addf %190, %191 : vector<2x32xf32>
    %193 = math.tanh %192 : vector<2x32xf32>
    %194 = arith.mulf %189, %193 : vector<2x32xf32>
    %195 = arith.negf %174 : vector<2x128xf32>
    %196 = math.exp %195 : vector<2x128xf32>
    %cst_50 = arith.constant 1.000000e+00 : f32
    %197 = vector.broadcast %cst_50 : f32 to vector<2x128xf32>
    %198 = arith.addf %197, %196 : vector<2x128xf32>
    %199 = arith.divf %197, %198 : vector<2x128xf32>
    %200 = vector.extract_strided_slice %199 {offsets = [0, 0], sizes = [2, 32], strides = [1, 1]} : vector<2x128xf32> to vector<2x32xf32>
    %201 = vector.extract_strided_slice %199 {offsets = [0, 32], sizes = [2, 32], strides = [1, 1]} : vector<2x128xf32> to vector<2x32xf32>
    %202 = vector.extract_strided_slice %199 {offsets = [0, 64], sizes = [2, 32], strides = [1, 1]} : vector<2x128xf32> to vector<2x32xf32>
    %cst_51 = arith.constant 2.000000e+00 : f32
    %203 = vector.broadcast %cst_51 : f32 to vector<2x32xf32>
    %204 = arith.mulf %203, %202 : vector<2x32xf32>
    %cst_52 = arith.constant 1.000000e+00 : f32
    %205 = vector.broadcast %cst_52 : f32 to vector<2x32xf32>
    %206 = arith.subf %204, %205 : vector<2x32xf32>
    %207 = vector.extract_strided_slice %199 {offsets = [0, 96], sizes = [2, 32], strides = [1, 1]} : vector<2x128xf32> to vector<2x32xf32>
    %208 = arith.mulf %201, %166 : vector<2x32xf32>
    %209 = arith.mulf %200, %206 : vector<2x32xf32>
    %210 = arith.addf %208, %209 : vector<2x32xf32>
    %211 = math.tanh %210 : vector<2x32xf32>
    %212 = arith.mulf %207, %211 : vector<2x32xf32>
    %cst_53 = arith.constant dense<0.000000e+00> : vector<2x128xf32>
    %213 = tpu.matmul %212, %2, %cst_53 {dimension_numbers = #tpu.dot_dimension_numbers<[1], [0], [0], [1], [0, 0, 1, 1], [], []>} : vector<2x32xf32>, vector<32x128xf32>, vector<2x128xf32> -> vector<2x128xf32>
    %214 = vector.broadcast %5 : vector<1x128xf32> to vector<2x128xf32>
    %215 = arith.addf %213, %214 : vector<2x128xf32>
    %216 = vector.extract_strided_slice %14 {offsets = [10, 0], sizes = [2, 128], strides = [1, 1]} : vector<16x128xf32> to vector<2x128xf32>
    %cst_54 = arith.constant dense<0.000000e+00> : vector<2x128xf32>
    %217 = tpu.matmul %212, %1, %cst_54 {dimension_numbers = #tpu.dot_dimension_numbers<[1], [0], [0], [1], [0, 0, 1, 1], [], []>} : vector<2x32xf32>, vector<32x128xf32>, vector<2x128xf32> -> vector<2x128xf32>
    %218 = arith.addf %216, %217 : vector<2x128xf32>
    %cst_55 = arith.constant dense<0.000000e+00> : vector<2x128xf32>
    %219 = tpu.matmul %194, %3, %cst_55 {dimension_numbers = #tpu.dot_dimension_numbers<[1], [0], [0], [1], [0, 0, 1, 1], [], []>} : vector<2x32xf32>, vector<32x128xf32>, vector<2x128xf32> -> vector<2x128xf32>
    %220 = arith.addf %215, %219 : vector<2x128xf32>
    %221 = arith.negf %220 : vector<2x128xf32>
    %222 = math.exp %221 : vector<2x128xf32>
    %cst_56 = arith.constant 1.000000e+00 : f32
    %223 = vector.broadcast %cst_56 : f32 to vector<2x128xf32>
    %224 = arith.addf %223, %222 : vector<2x128xf32>
    %225 = arith.divf %223, %224 : vector<2x128xf32>
    %226 = vector.extract_strided_slice %225 {offsets = [0, 0], sizes = [2, 32], strides = [1, 1]} : vector<2x128xf32> to vector<2x32xf32>
    %227 = vector.extract_strided_slice %225 {offsets = [0, 32], sizes = [2, 32], strides = [1, 1]} : vector<2x128xf32> to vector<2x32xf32>
    %228 = vector.extract_strided_slice %225 {offsets = [0, 64], sizes = [2, 32], strides = [1, 1]} : vector<2x128xf32> to vector<2x32xf32>
    %cst_57 = arith.constant 2.000000e+00 : f32
    %229 = vector.broadcast %cst_57 : f32 to vector<2x32xf32>
    %230 = arith.mulf %229, %228 : vector<2x32xf32>
    %cst_58 = arith.constant 1.000000e+00 : f32
    %231 = vector.broadcast %cst_58 : f32 to vector<2x32xf32>
    %232 = arith.subf %230, %231 : vector<2x32xf32>
    %233 = vector.extract_strided_slice %225 {offsets = [0, 96], sizes = [2, 32], strides = [1, 1]} : vector<2x128xf32> to vector<2x32xf32>
    %234 = arith.mulf %227, %192 : vector<2x32xf32>
    %235 = arith.mulf %226, %232 : vector<2x32xf32>
    %236 = arith.addf %234, %235 : vector<2x32xf32>
    %237 = math.tanh %236 : vector<2x32xf32>
    %238 = arith.mulf %233, %237 : vector<2x32xf32>
    %239 = arith.negf %218 : vector<2x128xf32>
    %240 = math.exp %239 : vector<2x128xf32>
    %cst_59 = arith.constant 1.000000e+00 : f32
    %241 = vector.broadcast %cst_59 : f32 to vector<2x128xf32>
    %242 = arith.addf %241, %240 : vector<2x128xf32>
    %243 = arith.divf %241, %242 : vector<2x128xf32>
    %244 = vector.extract_strided_slice %243 {offsets = [0, 0], sizes = [2, 32], strides = [1, 1]} : vector<2x128xf32> to vector<2x32xf32>
    %245 = vector.extract_strided_slice %243 {offsets = [0, 32], sizes = [2, 32], strides = [1, 1]} : vector<2x128xf32> to vector<2x32xf32>
    %246 = vector.extract_strided_slice %243 {offsets = [0, 64], sizes = [2, 32], strides = [1, 1]} : vector<2x128xf32> to vector<2x32xf32>
    %cst_60 = arith.constant 2.000000e+00 : f32
    %247 = vector.broadcast %cst_60 : f32 to vector<2x32xf32>
    %248 = arith.mulf %247, %246 : vector<2x32xf32>
    %cst_61 = arith.constant 1.000000e+00 : f32
    %249 = vector.broadcast %cst_61 : f32 to vector<2x32xf32>
    %250 = arith.subf %248, %249 : vector<2x32xf32>
    %251 = vector.extract_strided_slice %243 {offsets = [0, 96], sizes = [2, 32], strides = [1, 1]} : vector<2x128xf32> to vector<2x32xf32>
    %252 = arith.mulf %245, %210 : vector<2x32xf32>
    %253 = arith.mulf %244, %250 : vector<2x32xf32>
    %254 = arith.addf %252, %253 : vector<2x32xf32>
    %255 = math.tanh %254 : vector<2x32xf32>
    %256 = arith.mulf %251, %255 : vector<2x32xf32>
    %cst_62 = arith.constant dense<0.000000e+00> : vector<2x128xf32>
    %257 = tpu.matmul %256, %2, %cst_62 {dimension_numbers = #tpu.dot_dimension_numbers<[1], [0], [0], [1], [0, 0, 1, 1], [], []>} : vector<2x32xf32>, vector<32x128xf32>, vector<2x128xf32> -> vector<2x128xf32>
    %258 = vector.broadcast %5 : vector<1x128xf32> to vector<2x128xf32>
    %259 = arith.addf %257, %258 : vector<2x128xf32>
    %260 = vector.extract_strided_slice %14 {offsets = [12, 0], sizes = [2, 128], strides = [1, 1]} : vector<16x128xf32> to vector<2x128xf32>
    %cst_63 = arith.constant dense<0.000000e+00> : vector<2x128xf32>
    %261 = tpu.matmul %256, %1, %cst_63 {dimension_numbers = #tpu.dot_dimension_numbers<[1], [0], [0], [1], [0, 0, 1, 1], [], []>} : vector<2x32xf32>, vector<32x128xf32>, vector<2x128xf32> -> vector<2x128xf32>
    %262 = arith.addf %260, %261 : vector<2x128xf32>
    %cst_64 = arith.constant dense<0.000000e+00> : vector<2x128xf32>
    %263 = tpu.matmul %238, %3, %cst_64 {dimension_numbers = #tpu.dot_dimension_numbers<[1], [0], [0], [1], [0, 0, 1, 1], [], []>} : vector<2x32xf32>, vector<32x128xf32>, vector<2x128xf32> -> vector<2x128xf32>
    %264 = arith.addf %259, %263 : vector<2x128xf32>
    %265 = arith.negf %264 : vector<2x128xf32>
    %266 = math.exp %265 : vector<2x128xf32>
    %cst_65 = arith.constant 1.000000e+00 : f32
    %267 = vector.broadcast %cst_65 : f32 to vector<2x128xf32>
    %268 = arith.addf %267, %266 : vector<2x128xf32>
    %269 = arith.divf %267, %268 : vector<2x128xf32>
    %270 = vector.extract_strided_slice %269 {offsets = [0, 0], sizes = [2, 32], strides = [1, 1]} : vector<2x128xf32> to vector<2x32xf32>
    %271 = vector.extract_strided_slice %269 {offsets = [0, 32], sizes = [2, 32], strides = [1, 1]} : vector<2x128xf32> to vector<2x32xf32>
    %272 = vector.extract_strided_slice %269 {offsets = [0, 64], sizes = [2, 32], strides = [1, 1]} : vector<2x128xf32> to vector<2x32xf32>
    %cst_66 = arith.constant 2.000000e+00 : f32
    %273 = vector.broadcast %cst_66 : f32 to vector<2x32xf32>
    %274 = arith.mulf %273, %272 : vector<2x32xf32>
    %cst_67 = arith.constant 1.000000e+00 : f32
    %275 = vector.broadcast %cst_67 : f32 to vector<2x32xf32>
    %276 = arith.subf %274, %275 : vector<2x32xf32>
    %277 = vector.extract_strided_slice %269 {offsets = [0, 96], sizes = [2, 32], strides = [1, 1]} : vector<2x128xf32> to vector<2x32xf32>
    %278 = arith.mulf %271, %236 : vector<2x32xf32>
    %279 = arith.mulf %270, %276 : vector<2x32xf32>
    %280 = arith.addf %278, %279 : vector<2x32xf32>
    %281 = math.tanh %280 : vector<2x32xf32>
    %282 = arith.mulf %277, %281 : vector<2x32xf32>
    %283 = arith.negf %262 : vector<2x128xf32>
    %284 = math.exp %283 : vector<2x128xf32>
    %cst_68 = arith.constant 1.000000e+00 : f32
    %285 = vector.broadcast %cst_68 : f32 to vector<2x128xf32>
    %286 = arith.addf %285, %284 : vector<2x128xf32>
    %287 = arith.divf %285, %286 : vector<2x128xf32>
    %288 = vector.extract_strided_slice %287 {offsets = [0, 0], sizes = [2, 32], strides = [1, 1]} : vector<2x128xf32> to vector<2x32xf32>
    %289 = vector.extract_strided_slice %287 {offsets = [0, 32], sizes = [2, 32], strides = [1, 1]} : vector<2x128xf32> to vector<2x32xf32>
    %290 = vector.extract_strided_slice %287 {offsets = [0, 64], sizes = [2, 32], strides = [1, 1]} : vector<2x128xf32> to vector<2x32xf32>
    %cst_69 = arith.constant 2.000000e+00 : f32
    %291 = vector.broadcast %cst_69 : f32 to vector<2x32xf32>
    %292 = arith.mulf %291, %290 : vector<2x32xf32>
    %cst_70 = arith.constant 1.000000e+00 : f32
    %293 = vector.broadcast %cst_70 : f32 to vector<2x32xf32>
    %294 = arith.subf %292, %293 : vector<2x32xf32>
    %295 = vector.extract_strided_slice %287 {offsets = [0, 96], sizes = [2, 32], strides = [1, 1]} : vector<2x128xf32> to vector<2x32xf32>
    %296 = arith.mulf %289, %254 : vector<2x32xf32>
    %297 = arith.mulf %288, %294 : vector<2x32xf32>
    %298 = arith.addf %296, %297 : vector<2x32xf32>
    %299 = math.tanh %298 : vector<2x32xf32>
    %300 = arith.mulf %295, %299 : vector<2x32xf32>
    %cst_71 = arith.constant dense<0.000000e+00> : vector<2x128xf32>
    %301 = tpu.matmul %300, %2, %cst_71 {dimension_numbers = #tpu.dot_dimension_numbers<[1], [0], [0], [1], [0, 0, 1, 1], [], []>} : vector<2x32xf32>, vector<32x128xf32>, vector<2x128xf32> -> vector<2x128xf32>
    %302 = vector.broadcast %5 : vector<1x128xf32> to vector<2x128xf32>
    %303 = arith.addf %301, %302 : vector<2x128xf32>
    %304 = vector.extract_strided_slice %14 {offsets = [14, 0], sizes = [2, 128], strides = [1, 1]} : vector<16x128xf32> to vector<2x128xf32>
    %cst_72 = arith.constant dense<0.000000e+00> : vector<2x128xf32>
    %305 = tpu.matmul %300, %1, %cst_72 {dimension_numbers = #tpu.dot_dimension_numbers<[1], [0], [0], [1], [0, 0, 1, 1], [], []>} : vector<2x32xf32>, vector<32x128xf32>, vector<2x128xf32> -> vector<2x128xf32>
    %306 = arith.addf %304, %305 : vector<2x128xf32>
    %cst_73 = arith.constant dense<0.000000e+00> : vector<2x128xf32>
    %307 = tpu.matmul %282, %3, %cst_73 {dimension_numbers = #tpu.dot_dimension_numbers<[1], [0], [0], [1], [0, 0, 1, 1], [], []>} : vector<2x32xf32>, vector<32x128xf32>, vector<2x128xf32> -> vector<2x128xf32>
    %308 = arith.addf %303, %307 : vector<2x128xf32>
    %309 = arith.negf %308 : vector<2x128xf32>
    %310 = math.exp %309 : vector<2x128xf32>
    %cst_74 = arith.constant 1.000000e+00 : f32
    %311 = vector.broadcast %cst_74 : f32 to vector<2x128xf32>
    %312 = arith.addf %311, %310 : vector<2x128xf32>
    %313 = arith.divf %311, %312 : vector<2x128xf32>
    %314 = vector.extract_strided_slice %313 {offsets = [0, 0], sizes = [2, 32], strides = [1, 1]} : vector<2x128xf32> to vector<2x32xf32>
    %315 = vector.extract_strided_slice %313 {offsets = [0, 32], sizes = [2, 32], strides = [1, 1]} : vector<2x128xf32> to vector<2x32xf32>
    %316 = vector.extract_strided_slice %313 {offsets = [0, 64], sizes = [2, 32], strides = [1, 1]} : vector<2x128xf32> to vector<2x32xf32>
    %cst_75 = arith.constant 2.000000e+00 : f32
    %317 = vector.broadcast %cst_75 : f32 to vector<2x32xf32>
    %318 = arith.mulf %317, %316 : vector<2x32xf32>
    %cst_76 = arith.constant 1.000000e+00 : f32
    %319 = vector.broadcast %cst_76 : f32 to vector<2x32xf32>
    %320 = arith.subf %318, %319 : vector<2x32xf32>
    %321 = vector.extract_strided_slice %313 {offsets = [0, 96], sizes = [2, 32], strides = [1, 1]} : vector<2x128xf32> to vector<2x32xf32>
    %322 = arith.mulf %315, %280 : vector<2x32xf32>
    %323 = arith.mulf %314, %320 : vector<2x32xf32>
    %324 = arith.addf %322, %323 : vector<2x32xf32>
    %325 = math.tanh %324 : vector<2x32xf32>
    %326 = arith.mulf %321, %325 : vector<2x32xf32>
    %327 = arith.negf %306 : vector<2x128xf32>
    %328 = math.exp %327 : vector<2x128xf32>
    %cst_77 = arith.constant 1.000000e+00 : f32
    %329 = vector.broadcast %cst_77 : f32 to vector<2x128xf32>
    %330 = arith.addf %329, %328 : vector<2x128xf32>
    %331 = arith.divf %329, %330 : vector<2x128xf32>
    %332 = vector.extract_strided_slice %331 {offsets = [0, 0], sizes = [2, 32], strides = [1, 1]} : vector<2x128xf32> to vector<2x32xf32>
    %333 = vector.extract_strided_slice %331 {offsets = [0, 32], sizes = [2, 32], strides = [1, 1]} : vector<2x128xf32> to vector<2x32xf32>
    %334 = vector.extract_strided_slice %331 {offsets = [0, 64], sizes = [2, 32], strides = [1, 1]} : vector<2x128xf32> to vector<2x32xf32>
    %cst_78 = arith.constant 2.000000e+00 : f32
    %335 = vector.broadcast %cst_78 : f32 to vector<2x32xf32>
    %336 = arith.mulf %335, %334 : vector<2x32xf32>
    %cst_79 = arith.constant 1.000000e+00 : f32
    %337 = vector.broadcast %cst_79 : f32 to vector<2x32xf32>
    %338 = arith.subf %336, %337 : vector<2x32xf32>
    %339 = vector.extract_strided_slice %331 {offsets = [0, 96], sizes = [2, 32], strides = [1, 1]} : vector<2x128xf32> to vector<2x32xf32>
    %340 = arith.mulf %333, %298 : vector<2x32xf32>
    %341 = arith.mulf %332, %338 : vector<2x32xf32>
    %342 = arith.addf %340, %341 : vector<2x32xf32>
    %343 = math.tanh %342 : vector<2x32xf32>
    %344 = arith.mulf %339, %343 : vector<2x32xf32>
    %cst_80 = arith.constant dense<0.000000e+00> : vector<2x128xf32>
    %345 = tpu.matmul %344, %2, %cst_80 {dimension_numbers = #tpu.dot_dimension_numbers<[1], [0], [0], [1], [0, 0, 1, 1], [], []>} : vector<2x32xf32>, vector<32x128xf32>, vector<2x128xf32> -> vector<2x128xf32>
    %346 = vector.broadcast %5 : vector<1x128xf32> to vector<2x128xf32>
    %347 = arith.addf %345, %346 : vector<2x128xf32>
    %cst_81 = arith.constant dense<0.000000e+00> : vector<2x128xf32>
    %348 = tpu.matmul %326, %3, %cst_81 {dimension_numbers = #tpu.dot_dimension_numbers<[1], [0], [0], [1], [0, 0, 1, 1], [], []>} : vector<2x32xf32>, vector<32x128xf32>, vector<2x128xf32> -> vector<2x128xf32>
    %349 = arith.addf %347, %348 : vector<2x128xf32>
    %350 = arith.negf %349 : vector<2x128xf32>
    %351 = math.exp %350 : vector<2x128xf32>
    %cst_82 = arith.constant 1.000000e+00 : f32
    %352 = vector.broadcast %cst_82 : f32 to vector<2x128xf32>
    %353 = arith.addf %352, %351 : vector<2x128xf32>
    %354 = arith.divf %352, %353 : vector<2x128xf32>
    %355 = vector.extract_strided_slice %354 {offsets = [0, 0], sizes = [2, 32], strides = [1, 1]} : vector<2x128xf32> to vector<2x32xf32>
    %356 = vector.extract_strided_slice %354 {offsets = [0, 32], sizes = [2, 32], strides = [1, 1]} : vector<2x128xf32> to vector<2x32xf32>
    %357 = vector.extract_strided_slice %354 {offsets = [0, 64], sizes = [2, 32], strides = [1, 1]} : vector<2x128xf32> to vector<2x32xf32>
    %cst_83 = arith.constant 2.000000e+00 : f32
    %358 = vector.broadcast %cst_83 : f32 to vector<2x32xf32>
    %359 = arith.mulf %358, %357 : vector<2x32xf32>
    %cst_84 = arith.constant 1.000000e+00 : f32
    %360 = vector.broadcast %cst_84 : f32 to vector<2x32xf32>
    %361 = arith.subf %359, %360 : vector<2x32xf32>
    %362 = vector.extract_strided_slice %354 {offsets = [0, 96], sizes = [2, 32], strides = [1, 1]} : vector<2x128xf32> to vector<2x32xf32>
    %363 = arith.mulf %356, %324 : vector<2x32xf32>
    %364 = arith.mulf %355, %361 : vector<2x32xf32>
    %365 = arith.addf %363, %364 : vector<2x32xf32>
    %366 = math.tanh %365 : vector<2x32xf32>
    %367 = arith.mulf %362, %366 : vector<2x32xf32>
    %368 = tpu.concatenate %62, %106, %150, %194, %238, %282, %326, %367 in 0 : vector<2x32xf32>, vector<2x32xf32>, vector<2x32xf32>, vector<2x32xf32>, vector<2x32xf32>, vector<2x32xf32>, vector<2x32xf32>, vector<2x32xf32> -> vector<16x32xf32>
    %cst_85 = arith.constant dense<0.000000e+00> : vector<16x128xf32>
    %369 = tpu.matmul %368, %4, %cst_85 {dimension_numbers = #tpu.dot_dimension_numbers<[1], [0], [0], [1], [0, 0, 1, 1], [], []>} : vector<16x32xf32>, vector<32x128xf32>, vector<16x128xf32> -> vector<16x128xf32>
    %370 = vector.broadcast %6 : vector<1x128xf32> to vector<16x128xf32>
    %371 = arith.addf %369, %370 : vector<16x128xf32>
    %cst_86 = arith.constant dense<0xFF800000> : vector<16xf32>
    %372 = vector.multi_reduction <maximumf>, %371, %cst_86 [1] : vector<16x128xf32> to vector<16xf32>
    %373 = vector.shape_cast %372 : vector<16xf32> to vector<16x1xf32>
    %374 = vector.broadcast %373 : vector<16x1xf32> to vector<16x128xf32>
    %375 = arith.subf %371, %374 : vector<16x128xf32>
    %376 = math.exp %375 : vector<16x128xf32>
    %cst_87 = arith.constant dense<0.000000e+00> : vector<16xf32>
    %377 = vector.multi_reduction <add>, %376, %cst_87 [1] : vector<16x128xf32> to vector<16xf32>
    %378 = vector.shape_cast %377 : vector<16xf32> to vector<16x1xf32>
    %379 = math.log %378 : vector<16x1xf32>
    %380 = arith.addf %373, %379 : vector<16x1xf32>
    %381 = vector.broadcast %8 : vector<16x1xi32> to vector<16x128xi32>
    %382 = arith.cmpi eq, %9, %381 : vector<16x128xi32>
    %cst_88 = arith.constant 0.000000e+00 : f32
    %383 = vector.broadcast %cst_88 : f32 to vector<16x128xf32>
    %384 = arith.select %382, %371, %383 : vector<16x128xi1>, vector<16x128xf32>
    %cst_89 = arith.constant dense<0.000000e+00> : vector<16xf32>
    %385 = vector.multi_reduction <add>, %384, %cst_89 [1] : vector<16x128xf32> to vector<16xf32>
    %386 = vector.shape_cast %385 : vector<16xf32> to vector<16x1xf32>
    %387 = arith.subf %386, %380 : vector<16x1xf32>
    %388 = tpu.iota {dimensions = array<i32: 0>} : vector<16x2xi32>
    %c2_i32 = arith.constant 2 : i32
    %c0_i32 = arith.constant 0 : i32
    %389 = arith.cmpi eq, %c2_i32, %c0_i32 : i32
    %c1_i32 = arith.constant 1 : i32
    %390 = arith.select %389, %c1_i32, %c2_i32 : i32
    %391 = vector.broadcast %390 : i32 to vector<16x2xi32>
    %392 = arith.remsi %388, %391 : vector<16x2xi32>
    %c0_i32_90 = arith.constant 0 : i32
    %393 = vector.broadcast %c0_i32_90 : i32 to vector<16x2xi32>
    %394 = arith.cmpi ne, %392, %393 : vector<16x2xi32>
    %c0_i32_91 = arith.constant 0 : i32
    %395 = vector.broadcast %c0_i32_91 : i32 to vector<16x2xi32>
    %396 = arith.cmpi slt, %392, %395 : vector<16x2xi32>
    %c0_i32_92 = arith.constant 0 : i32
    %397 = arith.cmpi slt, %390, %c0_i32_92 : i32
    %398 = vector.broadcast %397 : i1 to vector<16x2xi1>
    %399 = vector.broadcast %398 : vector<16x2xi1> to vector<16x2xi1>
    %400 = arith.xori %396, %399 : vector<16x2xi1>
    %401 = arith.andi %400, %394 : vector<16x2xi1>
    %402 = vector.broadcast %390 : i32 to vector<16x2xi32>
    %403 = arith.addi %392, %402 : vector<16x2xi32>
    %404 = arith.select %401, %403, %392 : vector<16x2xi1>, vector<16x2xi32>
    %405 = tpu.iota {dimensions = array<i32: 1>} : vector<16x2xi32>
    %406 = arith.cmpi eq, %404, %405 : vector<16x2xi32>
    %407 = arith.extui %406 : vector<16x2xi1> to vector<16x2xi32>
    %408 = arith.sitofp %407 : vector<16x2xi32> to vector<16x2xf32>
    %409 = vector.broadcast %387 : vector<16x1xf32> to vector<16x2xf32>
    %410 = arith.mulf %409, %408 : vector<16x2xf32>
    %cst_93 = arith.constant dense<0.000000e+00> : vector<2xf32>
    %411 = vector.multi_reduction <add>, %410, %cst_93 [0] : vector<16x2xf32> to vector<2xf32>
    %412 = vector.shape_cast %411 : vector<2xf32> to vector<1x2xf32>
    %c0_94 = arith.constant 0 : index
    %c0_95 = arith.constant 0 : index
    %413 = vector.load %arg3[%c0_94, %c0_95] : memref<1x2xf32, #tpu.memory_space<vmem>>, vector<1x2xf32>
    tpu.vector_store %arg3[%c0_94, %c0_95], %412 {strides = array<i32>} : memref<1x2xf32, #tpu.memory_space<vmem>>, vector<1x2xf32>,
    return
  }
}

</mosaic_0001>

<llo_original>
// kernel: rnnlm_forward.1
$region0: #{rnnlm_forward.1}
  #allocation0 [shape = 'u32[]', space=smem, size = 0x4, offset = 0x4, fixed_abs, tag = 'smem constant byte address 0x4 - core index']
  #allocation1 [shape = 'u32[72,128]{1,0:T(1,128)}', space=vmem, size = 0x9000, scoped, tag = 'internal scratch']
  %s0 = inlined_call_operand.vmem [shape: s32[16,2], index: 0, kind: input, shape index: {}]
  %s1 = inlined_call_operand.hbm [shape: f32[256,128], index: 1, kind: input, shape index: {}]
  %s2 = inlined_call_operand.vmem [shape: f32[2,128], index: 2, kind: input, shape index: {}]
  %s3 = inlined_call_operand.hbm [shape: f32[1,2], index: 3, kind: output, shape index: {}]
  %s4 = sld [smem:[#allocation0]]
  $region26: #{rnnlm_forward.1} parent=0
    _
  %s6 = ssub.s32 1, %s4
  %s7 = scalar_select 0, %s6, %s4
  $region1: #{rnnlm_forward.1} parent=0
    #allocation2 [shape = 'u8[131072]{0}', space=vmem, size = 0x20000, scoped, tag = 'input window, operand 1, single buffered']
    #allocation3 [shape = 's32[1]{0}', space=sflag, size = 0x4, scoped, tag = 'scoped memory for rnnlm_forward.1']
    #allocation4 [shape = 's32[1]{0}', space=sflag, size = 0x4, scoped, tag = 'scoped memory for rnnlm_forward.1']
    #allocation5 [shape = 'u8[512]{0}', space=vmem, size = 0x400, scoped, tag = 'output window, operand 0, single buffered']
    %8 = vsyncpa [#allocation3], 0
    %9 = vsyncpa [#allocation4], 0
    // Predicated region
    $region2: #{rnnlm_forward.1} parent=1 // pred_check
      _
    $region3: #{rnnlm_forward.1} parent=1 // pred_check_branch
      %11 = sbr.rel (0) target = $region5
    $region4: #{rnnlm_forward.1} parent=1 // pred_region
      _
    $region5: #{rnnlm_forward.1} parent=1 // pred_fallthru
      _
    // Predicated region
    $region6: #{rnnlm_forward.1} parent=1 // pred_check
      _
    $region7: #{rnnlm_forward.1} parent=1 // pred_check_branch
      %13 = sbr.rel (0) target = $region9
    $region8: #{rnnlm_forward.1} parent=1 // pred_region
      %15 = vsyncadd [#allocation3], 0
      %s16 = sshll.u32 %s1, 4
      %s17 = int_to_ptr.hbm [resolvable:$true] %s16
      %s18 = sshll.u32 [#allocation2], 4
      %s19 = int_to_ptr.vmem [resolvable:$true] %s18
      %24 = dma.hbm_to_vmem [thread:$0]  %s17, 4096, %s19, [#allocation3], 128, 128, 8
    $region9: #{rnnlm_forward.1} parent=1 // pred_fallthru
      _
    // Predicated region
    $region10: #{rnnlm_forward.1} parent=1 // pred_check
      _
    $region11: #{rnnlm_forward.1} parent=1 // pred_check_branch
      %26 = sbr.rel (0) target = $region13
    $region12: #{rnnlm_forward.1} parent=1 // pred_region
      _
    $region13: #{rnnlm_forward.1} parent=1 // pred_fallthru
      _
    // Predicated region
    $region14: #{rnnlm_forward.1} parent=1 // pred_check
      _
    $region15: #{rnnlm_forward.1} parent=1 // pred_check_branch
      %28 = sbr.rel (0) target = $region17
    $region16: #{rnnlm_forward.1} parent=1 // pred_region
      %30 = dma.done [#allocation3], 4096
    $region17: #{rnnlm_forward.1} parent=1 // pred_fallthru
      _
    %v31 = vld [vmem:[#allocation2] sm:$0xff]
    %v32 = vld [vmem:[#allocation2 + $0x8] sm:$0xff]
    %v33 = vld [vmem:[#allocation2 + $0x10] sm:$0xff]
    %v34 = vld [vmem:[#allocation2 + $0x18] sm:$0xff]
    %v35 = vld [vmem:[#allocation2 + $0x20] sm:$0xff]
    %v36 = vld [vmem:[#allocation2 + $0x28] sm:$0xff]
    %v37 = vld [vmem:[#allocation2 + $0x30] sm:$0xff]
    %v38 = vld [vmem:[#allocation2 + $0x38] sm:$0xff]
    %v39 = vld [vmem:[#allocation2 + $0x40] sm:$0xff]
    %v40 = vld [vmem:[#allocation2 + $0x48] sm:$0xff]
    %v41 = vld [vmem:[#allocation2 + $0x50] sm:$0xff]
    %v42 = vld [vmem:[#allocation2 + $0x58] sm:$0xff]
    %v43 = vld [vmem:[#allocation2 + $0x60] sm:$0xff]
    %v44 = vld [vmem:[#allocation2 + $0x68] sm:$0xff]
    %v45 = vld [vmem:[#allocation2 + $0x70] sm:$0xff]
    %v46 = vld [vmem:[#allocation2 + $0x78] sm:$0xff]
    %v47 = vld [vmem:[#allocation2 + $0x80] sm:$0xff]
    %v48 = vld [vmem:[#allocation2 + $0x88] sm:$0xff]
    %v49 = vld [vmem:[#allocation2 + $0x90] sm:$0xff]
    %v50 = vld [vmem:[#allocation2 + $0x98] sm:$0xff]
    %v51 = vld [vmem:[#allocation2 + $0xa0] sm:$0xff]
    %v52 = vld [vmem:[#allocation2 + $0xa8] sm:$0xff]
    %v53 = vld [vmem:[#allocation2 + $0xb0] sm:$0xff]
    %v54 = vld [vmem:[#allocation2 + $0xb8] sm:$0xff]
    %v55 = vld [vmem:[#allocation2 + $0xc0] sm:$0xff]
    %v56 = vld [vmem:[#allocation2 + $0xc8] sm:$0xff]
    %v57 = vld [vmem:[#allocation2 + $0xd0] sm:$0xff]
    %v58 = vld [vmem:[#allocation2 + $0xd8] sm:$0xff]
    %v59 = vld [vmem:[#allocation2 + $0xe0] sm:$0xff]
    %v60 = vld [vmem:[#allocation2 + $0xe8] sm:$0xff]
    %v61 = vld [vmem:[#allocation2 + $0xf0] sm:$0xff]
    %v62 = vld [vmem:[#allocation2 + $0xf8] sm:$0xff]
    %v63 = vld [vmem:[%s2] sm:$0x1]
    %v64 = vld [vmem:[%s2 + $0x1] sm:$0x1]
    %v65 = vld [vmem:[%s0] sm:$0xff]
    %v66 = vld [vmem:[%s0 + $0x8] sm:$0xff]
    %v67 = vlaneseq
    %v68 = vand.u32 %v67, 127
    %69 = vset.pattern.permute.xlu0 0
    %70 = vperm.xlu0 %69, %v65
    %v71 = vpop.permute.xlu0 %70
    %72 = vset.pattern.permute.xlu0 0
    %73 = vperm.xlu0 %72, %v66
    %v74 = vpop.permute.xlu0 %73
    %vm75 = vcmp.eq.s32.totalorder %v68, %v71
    %vm76 = vcmp.eq.s32.totalorder %v68, %v74
    %v77 = vsel %vm75, 1, 0
    %v78 = vsel %vm76, 1, 0
    %v79 = vcvt.s32.f32 %v77
    %v80 = vcvt.s32.f32 %v78
    %81 = vmatpush.msra.mxu0 %v46
    %82 = vmatpush.msra.mxu0 %v45
    %83 = vmatpush.msra.mxu0 %v44
    %84 = vmatpush.msra.mxu0 %v43
    %85 = vmatpush.msra.mxu0 %v42
    %86 = vmatpush.msra.mxu0 %v41
    %87 = vmatpush.msra.mxu0 %v40
    %88 = vmatpush.msra.mxu0 %v39
    %89 = vmatpush.msra.mxu0 %v38
    %90 = vmatpush.msra.mxu0 %v37
    %91 = vmatpush.msra.mxu0 %v36
    %92 = vmatpush.msra.mxu0 %v35
    %93 = vmatpush.msra.mxu0 %v34
    %94 = vmatpush.msra.mxu0 %v33
    %95 = vmatpush.msra.mxu0 %v32
    %96 = vmatpush.msra.mxu0 %v31
    %97 = vmatmul.f32.gmra.mxu0 %v79
    %v98 = vpop.f32.mrf.mxu0
    %v99 = vadd.f32 0.0, %v98
    %100 = vmatmul.f32.gmra.mxu0 %v80
    %v101 = vpop.f32.mrf.mxu0
    %v102 = vadd.f32 0.0, %v101
    %103 = vdwg.mxu0
    %vm104 = vcmask 261120
    %v106 = vsel %vm104, 0.0, 0
    %108 = vmatpush.msra.mxu0 0.0
    %109 = vmatpush.msra.mxu0 0.0
    %110 = vmatpush.msra.mxu0 0.0
    %111 = vmatpush.msra.mxu0 0.0
    %112 = vmatpush.msra.mxu0 0.0
    %113 = vmatpush.msra.mxu0 0.0
    %114 = vmatpush.msra.mxu0 0.0
    %115 = vmatpush.msra.mxu0 0.0
    %116 = vmatpush.msra.mxu0 0.0
    %117 = vmatpush.msra.mxu0 0.0
    %118 = vmatpush.msra.mxu0 0.0
    %119 = vmatpush.msra.mxu0 0.0
    %120 = vmatpush.msra.mxu0 %v50
    %121 = vmatpush.msra.mxu0 %v49
    %122 = vmatpush.msra.mxu0 %v48
    %123 = vmatpush.msra.mxu0 %v47
    %124 = vmatmul.f32.gmra.mxu0 %v106
    %v125 = vpop.f32.mrf.mxu0
    %v126 = vadd.f32 0.0, %v125
    %127 = vdwg.mxu0
    %v128 = vadd.f32 %v99, %v126
    %v129 = vxor.u32 %v128, 2147483648
    %v130 = vmul.f32 %v129, 1.442695
    %v131 = vpow.pop %v130
    %v132 = vadd.f32 %v131, 1.0
    %v133 = vrcp.pop %v132
    %v134 = vmul.f32 %v132, %v133
    %v135 = vsub.f32 1.0, %v134
    %v136 = vmul.f32 %v133, %v135
    %v137 = vadd.f32 %v133, %v136
    %vm138 = vweird.f32 %v132
    %vm139 = vweird.f32 %v133
    %vm140 = vmor %vm138, %vm139
    %v141 = vsel %vm140, %v133, %v137
    %v142 = vand.u32 2147483647, %v132
    %vm143 = vcmp.eq.f32.partialorder %v142, 8.507059e+37
    %v144 = vand.u32 %v132, 2147483648
    %v145 = vor.u32 1.1754944e-38, %v144
    %v146 = vsel %vm143, %v145, %v141
    %v147 = vmul.f32 1.0, %v146
    %v148 = vmul.f32 %v147, 2.0
    %v149 = vsub.f32 %v148, 1.0
    %v150 = vmul.f32 %v147, 0.0
    %152 = vrot.lane.b32.xlu0 %v149, 64
    %v153 = vpop.permute.xlu0 %152
    %v155 = vmul.f32 %v147, %v153
    %157 = vrot.lane.b32.xlu0 %v155, 32
    %v158 = vpop.permute.xlu0 %157
    %v160 = vadd.f32 %v150, %v158
    %v161 = vtanh.pop %v160
    %163 = vrot.lane.b32.xlu0 %v161, 64
    %v164 = vpop.permute.xlu0 %163
    %v166 = vmul.f32 %v147, %v164
    %v167 = vperm.slane %v63, 0
    %169 = vrot.lane.b32.xlu0 %v166, 32
    %v170 = vpop.permute.xlu0 %169
    %v171 = vsel %vm104, %v170, 0
    %173 = vmatpush.msra.mxu0 0.0
    %174 = vmatpush.msra.mxu0 0.0
    %175 = vmatpush.msra.mxu0 0.0
    %176 = vmatpush.msra.mxu0 0.0
    %177 = vmatpush.msra.mxu0 0.0
    %178 = vmatpush.msra.mxu0 0.0
    %179 = vmatpush.msra.mxu0 0.0
    %180 = vmatpush.msra.mxu0 0.0
    %181 = vmatpush.msra.mxu0 0.0
    %182 = vmatpush.msra.mxu0 0.0
    %183 = vmatpush.msra.mxu0 0.0
    %184 = vmatpush.msra.mxu0 0.0
    %185 = vmatpush.msra.mxu0 %v54
    %186 = vmatpush.msra.mxu0 %v53
    %187 = vmatpush.msra.mxu0 %v52
    %188 = vmatpush.msra.mxu0 %v51
    %189 = vmatmul.f32.gmra.mxu0 %v171
    %v190 = vpop.f32.mrf.mxu0
    %v191 = vadd.f32 %v167, %v190
    %192 = vdwg.mxu0
    %193 = vmatpush.msra.mxu0 0.0
    %194 = vmatpush.msra.mxu0 0.0
    %195 = vmatpush.msra.mxu0 0.0
    %196 = vmatpush.msra.mxu0 0.0
    %197 = vmatpush.msra.mxu0 0.0
    %198 = vmatpush.msra.mxu0 0.0
    %199 = vmatpush.msra.mxu0 0.0
    %200 = vmatpush.msra.mxu0 0.0
    %201 = vmatpush.msra.mxu0 0.0
    %202 = vmatpush.msra.mxu0 0.0
    %203 = vmatpush.msra.mxu0 0.0
    %204 = vmatpush.msra.mxu0 0.0
    %205 = vmatpush.msra.mxu0 %v50
    %206 = vmatpush.msra.mxu0 %v49
    %207 = vmatpush.msra.mxu0 %v48
    %208 = vmatpush.msra.mxu0 %v47
    %209 = vmatmul.f32.gmra.mxu0 %v171
    %v210 = vpop.f32.mrf.mxu0
    %v211 = vadd.f32 0.0, %v210
    %212 = vdwg.mxu0
    %v214 = vrot.slane %v211, 6
    %v216 = vadd.f32 %v99, %v214
    %217 = vmatpush.msra.mxu0 0.0
    %218 = vmatpush.msra.mxu0 0.0
    %219 = vmatpush.msra.mxu0 0.0
    %220 = vmatpush.msra.mxu0 0.0
    %221 = vmatpush.msra.mxu0 0.0
    %222 = vmatpush.msra.mxu0 0.0
    %223 = vmatpush.msra.mxu0 0.0
    %224 = vmatpush.msra.mxu0 0.0
    %225 = vmatpush.msra.mxu0 0.0
    %226 = vmatpush.msra.mxu0 0.0
    %227 = vmatpush.msra.mxu0 0.0
    %228 = vmatpush.msra.mxu0 0.0
    %229 = vmatpush.msra.mxu0 %v58
    %230 = vmatpush.msra.mxu0 %v57
    %231 = vmatpush.msra.mxu0 %v56
    %232 = vmatpush.msra.mxu0 %v55
    %233 = vmatmul.f32.gmra.mxu0 %v106
    %v234 = vpop.f32.mrf.mxu0
    %v235 = vadd.f32 0.0, %v234
    %236 = vdwg.mxu0
    %v237 = vadd.f32 %v191, %v235
    %v238 = vxor.u32 %v237, 2147483648
    %v239 = vmul.f32 %v238, 1.442695
    %v240 = vpow.pop %v239
    %v241 = vadd.f32 %v240, 1.0
    %v242 = vrcp.pop %v241
    %v243 = vmul.f32 %v241, %v242
    %v244 = vsub.f32 1.0, %v243
    %v245 = vmul.f32 %v242, %v244
    %v246 = vadd.f32 %v242, %v245
    %vm247 = vweird.f32 %v241
    %vm248 = vweird.f32 %v242
    %vm249 = vmor %vm247, %vm248
    %v250 = vsel %vm249, %v242, %v246
    %v251 = vand.u32 2147483647, %v241
    %vm252 = vcmp.eq.f32.partialorder %v251, 8.507059e+37
    %v253 = vand.u32 %v241, 2147483648
    %v254 = vor.u32 1.1754944e-38, %v253
    %v255 = vsel %vm252, %v254, %v250
    %v256 = vmul.f32 1.0, %v255
    %v257 = vmul.f32 %v256, 2.0
    %v258 = vsub.f32 %v257, 1.0
    %v259 = vmul.f32 %v256, 0.0
    %261 = vrot.lane.b32.xlu0 %v258, 64
    %v262 = vpop.permute.xlu0 %261
    %v264 = vmul.f32 %v256, %v262
    %266 = vrot.lane.b32.xlu0 %v264, 32
    %v267 = vpop.permute.xlu0 %266
    %v269 = vadd.f32 %v259, %v267
    %v270 = vtanh.pop %v269
    %272 = vrot.lane.b32.xlu0 %v270, 64
    %v273 = vpop.permute.xlu0 %272
    %v275 = vmul.f32 %v256, %v273
    %v276 = vxor.u32 %v216, 2147483648
    %v277 = vmul.f32 %v276, 1.442695
    %v278 = vpow.pop %v277
    %v279 = vadd.f32 %v278, 1.0
    %v280 = vrcp.pop %v279
    %v281 = vmul.f32 %v279, %v280
    %v282 = vsub.f32 1.0, %v281
    %v283 = vmul.f32 %v280, %v282
    %v284 = vadd.f32 %v280, %v283
    %vm285 = vweird.f32 %v279
    %vm286 = vweird.f32 %v280
    %vm287 = vmor %vm285, %vm286
    %v288 = vsel %vm287, %v280, %v284
    %v289 = vand.u32 2147483647, %v279
    %vm290 = vcmp.eq.f32.partialorder %v289, 8.507059e+37
    %v291 = vand.u32 %v279, 2147483648
    %v292 = vor.u32 1.1754944e-38, %v291
    %v293 = vsel %vm290, %v292, %v288
    %v294 = vmul.f32 1.0, %v293
    %v295 = vmul.f32 %v294, 2.0
    %v296 = vsub.f32 %v295, 1.0
    %v298 = vrot.slane %v160, 6
    %v300 = vmul.f32 %v294, %v298
    %302 = vrot.lane.b32.xlu0 %v296, 64
    %v303 = vpop.permute.xlu0 %302
    %v305 = vmul.f32 %v294, %v303
    %307 = vrot.lane.b32.xlu0 %v305, 32
    %v308 = vpop.permute.xlu0 %307
    %v310 = vadd.f32 %v300, %v308
    %v311 = vtanh.pop %v310
    %313 = vrot.lane.b32.xlu0 %v311, 64
    %v314 = vpop.permute.xlu0 %313
    %v316 = vmul.f32 %v294, %v314
    %v318 = vrot.slane %v316, 2
    %319 = vrot.lane.b32.xlu0 %v318, 32
    %v320 = vpop.permute.xlu0 %319
    %v321 = vsel %vm104, %v320, 0
    %323 = vmatpush.msra.mxu0 0.0
    %324 = vmatpush.msra.mxu0 0.0
    %325 = vmatpush.msra.mxu0 0.0
    %326 = vmatpush.msra.mxu0 0.0
    %327 = vmatpush.msra.mxu0 0.0
    %328 = vmatpush.msra.mxu0 0.0
    %329 = vmatpush.msra.mxu0 0.0
    %330 = vmatpush.msra.mxu0 0.0
    %331 = vmatpush.msra.mxu0 0.0
    %332 = vmatpush.msra.mxu0 0.0
    %333 = vmatpush.msra.mxu0 0.0
    %334 = vmatpush.msra.mxu0 0.0
    %335 = vmatpush.msra.mxu0 %v54
    %336 = vmatpush.msra.mxu0 %v53
    %337 = vmatpush.msra.mxu0 %v52
    %338 = vmatpush.msra.mxu0 %v51
    %339 = vmatmul.f32.gmra.mxu0 %v321
    %v340 = vpop.f32.mrf.mxu0
    %v341 = vadd.f32 %v167, %v340
    %342 = vdwg.mxu0
    %343 = vmatpush.msra.mxu0 0.0
    %344 = vmatpush.msra.mxu0 0.0
    %345 = vmatpush.msra.mxu0 0.0
    %346 = vmatpush.msra.mxu0 0.0
    %347 = vmatpush.msra.mxu0 0.0
    %348 = vmatpush.msra.mxu0 0.0
    %349 = vmatpush.msra.mxu0 0.0
    %350 = vmatpush.msra.mxu0 0.0
    %351 = vmatpush.msra.mxu0 0.0
    %352 = vmatpush.msra.mxu0 0.0
    %353 = vmatpush.msra.mxu0 0.0
    %354 = vmatpush.msra.mxu0 0.0
    %355 = vmatpush.msra.mxu0 %v50
    %356 = vmatpush.msra.mxu0 %v49
    %357 = vmatpush.msra.mxu0 %v48
    %358 = vmatpush.msra.mxu0 %v47
    %359 = vmatmul.f32.gmra.mxu0 %v321
    %v360 = vpop.f32.mrf.mxu0
    %v361 = vadd.f32 0.0, %v360
    %362 = vdwg.mxu0
    %v364 = vrot.slane %v361, 4
    %v366 = vadd.f32 %v99, %v364
    %368 = vrot.lane.b32.xlu0 %v275, 32
    %v369 = vpop.permute.xlu0 %368
    %v370 = vsel %vm104, %v369, 0
    %372 = vmatpush.msra.mxu0 0.0
    %373 = vmatpush.msra.mxu0 0.0
    %374 = vmatpush.msra.mxu0 0.0
    %375 = vmatpush.msra.mxu0 0.0
    %376 = vmatpush.msra.mxu0 0.0
    %377 = vmatpush.msra.mxu0 0.0
    %378 = vmatpush.msra.mxu0 0.0
    %379 = vmatpush.msra.mxu0 0.0
    %380 = vmatpush.msra.mxu0 0.0
    %381 = vmatpush.msra.mxu0 0.0
    %382 = vmatpush.msra.mxu0 0.0
    %383 = vmatpush.msra.mxu0 0.0
    %384 = vmatpush.msra.mxu0 %v58
    %385 = vmatpush.msra.mxu0 %v57
    %386 = vmatpush.msra.mxu0 %v56
    %387 = vmatpush.msra.mxu0 %v55
    %388 = vmatmul.f32.gmra.mxu0 %v370
    %v389 = vpop.f32.mrf.mxu0
    %v390 = vadd.f32 0.0, %v389
    %391 = vdwg.mxu0
    %v392 = vadd.f32 %v341, %v390
    %v393 = vxor.u32 %v392, 2147483648
    %v394 = vmul.f32 %v393, 1.442695
    %v395 = vpow.pop %v394
    %v396 = vadd.f32 %v395, 1.0
    %v397 = vrcp.pop %v396
    %v398 = vmul.f32 %v396, %v397
    %v399 = vsub.f32 1.0, %v398
    %v400 = vmul.f32 %v397, %v399
    %v401 = vadd.f32 %v397, %v400
    %vm402 = vweird.f32 %v396
    %vm403 = vweird.f32 %v397
    %vm404 = vmor %vm402, %vm403
    %v405 = vsel %vm404, %v397, %v401
    %v406 = vand.u32 2147483647, %v396
    %vm407 = vcmp.eq.f32.partialorder %v406, 8.507059e+37
    %v408 = vand.u32 %v396, 2147483648
    %v409 = vor.u32 1.1754944e-38, %v408
    %v410 = vsel %vm407, %v409, %v405
    %v411 = vmul.f32 1.0, %v410
    %v412 = vmul.f32 %v411, 2.0
    %v413 = vsub.f32 %v412, 1.0
    %v414 = vmul.f32 %v411, %v269
    %416 = vrot.lane.b32.xlu0 %v413, 64
    %v417 = vpop.permute.xlu0 %416
    %v419 = vmul.f32 %v411, %v417
    %421 = vrot.lane.b32.xlu0 %v419, 32
    %v422 = vpop.permute.xlu0 %421
    %v424 = vadd.f32 %v414, %v422
    %v425 = vtanh.pop %v424
    %427 = vrot.lane.b32.xlu0 %v425, 64
    %v428 = vpop.permute.xlu0 %427
    %v430 = vmul.f32 %v411, %v428
    %v431 = vxor.u32 %v366, 2147483648
    %v432 = vmul.f32 %v431, 1.442695
    %v433 = vpow.pop %v432
    %v434 = vadd.f32 %v433, 1.0
    %v435 = vrcp.pop %v434
    %v436 = vmul.f32 %v434, %v435
    %v437 = vsub.f32 1.0, %v436
    %v438 = vmul.f32 %v435, %v437
    %v439 = vadd.f32 %v435, %v438
    %vm440 = vweird.f32 %v434
    %vm441 = vweird.f32 %v435
    %vm442 = vmor %vm440, %vm441
    %v443 = vsel %vm442, %v435, %v439
    %v444 = vand.u32 2147483647, %v434
    %vm445 = vcmp.eq.f32.partialorder %v444, 8.507059e+37
    %v446 = vand.u32 %v434, 2147483648
    %v447 = vor.u32 1.1754944e-38, %v446
    %v448 = vsel %vm445, %v447, %v443
    %v449 = vmul.f32 1.0, %v448
    %v450 = vmul.f32 %v449, 2.0
    %v451 = vsub.f32 %v450, 1.0
    %v453 = vrot.slane %v310, 6
    %v455 = vmul.f32 %v449, %v453
    %457 = vrot.lane.b32.xlu0 %v451, 64
    %v458 = vpop.permute.xlu0 %457
    %v460 = vmul.f32 %v449, %v458
    %462 = vrot.lane.b32.xlu0 %v460, 32
    %v463 = vpop.permute.xlu0 %462
    %v465 = vadd.f32 %v455, %v463
    %v466 = vtanh.pop %v465
    %468 = vrot.lane.b32.xlu0 %v466, 64
    %v469 = vpop.permute.xlu0 %468
    %v471 = vmul.f32 %v449, %v469
    %v473 = vrot.slane %v471, 4
    %474 = vrot.lane.b32.xlu0 %v473, 32
    %v475 = vpop.permute.xlu0 %474
    %v476 = vsel %vm104, %v475, 0
    %478 = vmatpush.msra.mxu0 0.0
    %479 = vmatpush.msra.mxu0 0.0
    %480 = vmatpush.msra.mxu0 0.0
    %481 = vmatpush.msra.mxu0 0.0
    %482 = vmatpush.msra.mxu0 0.0
    %483 = vmatpush.msra.mxu0 0.0
    %484 = vmatpush.msra.mxu0 0.0
    %485 = vmatpush.msra.mxu0 0.0
    %486 = vmatpush.msra.mxu0 0.0
    %487 = vmatpush.msra.mxu0 0.0
    %488 = vmatpush.msra.mxu0 0.0
    %489 = vmatpush.msra.mxu0 0.0
    %490 = vmatpush.msra.mxu0 %v54
    %491 = vmatpush.msra.mxu0 %v53
    %492 = vmatpush.msra.mxu0 %v52
    %493 = vmatpush.msra.mxu0 %v51
    %494 = vmatmul.f32.gmra.mxu0 %v476
    %v495 = vpop.f32.mrf.mxu0
    %v496 = vadd.f32 %v167, %v495
    %497 = vdwg.mxu0
    %498 = vmatpush.msra.mxu0 0.0
    %499 = vmatpush.msra.mxu0 0.0
    %500 = vmatpush.msra.mxu0 0.0
    %501 = vmatpush.msra.mxu0 0.0
    %502 = vmatpush.msra.mxu0 0.0
    %503 = vmatpush.msra.mxu0 0.0
    %504 = vmatpush.msra.mxu0 0.0
    %505 = vmatpush.msra.mxu0 0.0
    %506 = vmatpush.msra.mxu0 0.0
    %507 = vmatpush.msra.mxu0 0.0
    %508 = vmatpush.msra.mxu0 0.0
    %509 = vmatpush.msra.mxu0 0.0
    %510 = vmatpush.msra.mxu0 %v50
    %511 = vmatpush.msra.mxu0 %v49
    %512 = vmatpush.msra.mxu0 %v48
    %513 = vmatpush.msra.mxu0 %v47
    %514 = vmatmul.f32.gmra.mxu0 %v476
    %v515 = vpop.f32.mrf.mxu0
    %v516 = vadd.f32 0.0, %v515
    %517 = vdwg.mxu0
    %v519 = vrot.slane %v516, 2
    %v521 = vadd.f32 %v99, %v519
    %523 = vrot.lane.b32.xlu0 %v430, 32
    %v524 = vpop.permute.xlu0 %523
    %v525 = vsel %vm104, %v524, 0
    %527 = vmatpush.msra.mxu0 0.0
    %528 = vmatpush.msra.mxu0 0.0
    %529 = vmatpush.msra.mxu0 0.0
    %530 = vmatpush.msra.mxu0 0.0
    %531 = vmatpush.msra.mxu0 0.0
    %532 = vmatpush.msra.mxu0 0.0
    %533 = vmatpush.msra.mxu0 0.0
    %534 = vmatpush.msra.mxu0 0.0
    %535 = vmatpush.msra.mxu0 0.0
    %536 = vmatpush.msra.mxu0 0.0
    %537 = vmatpush.msra.mxu0 0.0
    %538 = vmatpush.msra.mxu0 0.0
    %539 = vmatpush.msra.mxu0 %v58
    %540 = vmatpush.msra.mxu0 %v57
    %541 = vmatpush.msra.mxu0 %v56
    %542 = vmatpush.msra.mxu0 %v55
    %543 = vmatmul.f32.gmra.mxu0 %v525
    %v544 = vpop.f32.mrf.mxu0
    %v545 = vadd.f32 0.0, %v544
    %546 = vdwg.mxu0
    %v547 = vadd.f32 %v496, %v545
    %v548 = vxor.u32 %v547, 2147483648
    %v549 = vmul.f32 %v548, 1.442695
    %v550 = vpow.pop %v549
    %v551 = vadd.f32 %v550, 1.0
    %v552 = vrcp.pop %v551
    %v553 = vmul.f32 %v551, %v552
    %v554 = vsub.f32 1.0, %v553
    %v555 = vmul.f32 %v552, %v554
    %v556 = vadd.f32 %v552, %v555
    %vm557 = vweird.f32 %v551
    %vm558 = vweird.f32 %v552
    %vm559 = vmor %vm557, %vm558
    %v560 = vsel %vm559, %v552, %v556
    %v561 = vand.u32 2147483647, %v551
    %vm562 = vcmp.eq.f32.partialorder %v561, 8.507059e+37
    %v563 = vand.u32 %v551, 2147483648
    %v564 = vor.u32 1.1754944e-38, %v563
    %v565 = vsel %vm562, %v564, %v560
    %v566 = vmul.f32 1.0, %v565
    %v567 = vmul.f32 %v566, 2.0
    %v568 = vsub.f32 %v567, 1.0
    %v569 = vmul.f32 %v566, %v424
    %571 = vrot.lane.b32.xlu0 %v568, 64
    %v572 = vpop.permute.xlu0 %571
    %v574 = vmul.f32 %v566, %v572
    %576 = vrot.lane.b32.xlu0 %v574, 32
    %v577 = vpop.permute.xlu0 %576
    %v579 = vadd.f32 %v569, %v577
    %v580 = vtanh.pop %v579
    %582 = vrot.lane.b32.xlu0 %v580, 64
    %v583 = vpop.permute.xlu0 %582
    %v585 = vmul.f32 %v566, %v583
    %v586 = vxor.u32 %v521, 2147483648
    %v587 = vmul.f32 %v586, 1.442695
    %v588 = vpow.pop %v587
    %v589 = vadd.f32 %v588, 1.0
    %v590 = vrcp.pop %v589
    %v591 = vmul.f32 %v589, %v590
    %v592 = vsub.f32 1.0, %v591
    %v593 = vmul.f32 %v590, %v592
    %v594 = vadd.f32 %v590, %v593
    %vm595 = vweird.f32 %v589
    %vm596 = vweird.f32 %v590
    %vm597 = vmor %vm595, %vm596
    %v598 = vsel %vm597, %v590, %v594
    %v599 = vand.u32 2147483647, %v589
    %vm600 = vcmp.eq.f32.partialorder %v599, 8.507059e+37
    %v601 = vand.u32 %v589, 2147483648
    %v602 = vor.u32 1.1754944e-38, %v601
    %v603 = vsel %vm600, %v602, %v598
    %v604 = vmul.f32 1.0, %v603
    %v605 = vmul.f32 %v604, 2.0
    %v606 = vsub.f32 %v605, 1.0
    %v608 = vrot.slane %v465, 6
    %v610 = vmul.f32 %v604, %v608
    %612 = vrot.lane.b32.xlu0 %v606, 64
    %v613 = vpop.permute.xlu0 %612
    %v615 = vmul.f32 %v604, %v613
    %617 = vrot.lane.b32.xlu0 %v615, 32
    %v618 = vpop.permute.xlu0 %617
    %v620 = vadd.f32 %v610, %v618
    %v621 = vtanh.pop %v620
    %623 = vrot.lane.b32.xlu0 %v621, 64
    %v624 = vpop.permute.xlu0 %623
    %v626 = vmul.f32 %v604, %v624
    %v628 = vrot.slane %v626, 6
    %629 = vrot.lane.b32.xlu0 %v628, 32
    %v630 = vpop.permute.xlu0 %629
    %v631 = vsel %vm104, %v630, 0
    %633 = vmatpush.msra.mxu0 0.0
    %634 = vmatpush.msra.mxu0 0.0
    %635 = vmatpush.msra.mxu0 0.0
    %636 = vmatpush.msra.mxu0 0.0
    %637 = vmatpush.msra.mxu0 0.0
    %638 = vmatpush.msra.mxu0 0.0
    %639 = vmatpush.msra.mxu0 0.0
    %640 = vmatpush.msra.mxu0 0.0
    %641 = vmatpush.msra.mxu0 0.0
    %642 = vmatpush.msra.mxu0 0.0
    %643 = vmatpush.msra.mxu0 0.0
    %644 = vmatpush.msra.mxu0 0.0
    %645 = vmatpush.msra.mxu0 %v54
    %646 = vmatpush.msra.mxu0 %v53
    %647 = vmatpush.msra.mxu0 %v52
    %648 = vmatpush.msra.mxu0 %v51
    %649 = vmatmul.f32.gmra.mxu0 %v631
    %v650 = vpop.f32.mrf.mxu0
    %v651 = vadd.f32 %v167, %v650
    %652 = vdwg.mxu0
    %653 = vmatpush.msra.mxu0 0.0
    %654 = vmatpush.msra.mxu0 0.0
    %655 = vmatpush.msra.mxu0 0.0
    %656 = vmatpush.msra.mxu0 0.0
    %657 = vmatpush.msra.mxu0 0.0
    %658 = vmatpush.msra.mxu0 0.0
    %659 = vmatpush.msra.mxu0 0.0
    %660 = vmatpush.msra.mxu0 0.0
    %661 = vmatpush.msra.mxu0 0.0
    %662 = vmatpush.msra.mxu0 0.0
    %663 = vmatpush.msra.mxu0 0.0
    %664 = vmatpush.msra.mxu0 0.0
    %665 = vmatpush.msra.mxu0 %v50
    %666 = vmatpush.msra.mxu0 %v49
    %667 = vmatpush.msra.mxu0 %v48
    %668 = vmatpush.msra.mxu0 %v47
    %669 = vmatmul.f32.gmra.mxu0 %v631
    %v670 = vpop.f32.mrf.mxu0
    %v671 = vadd.f32 0.0, %v670
    %672 = vdwg.mxu0
    %v673 = vadd.f32 %v102, %v671
    %675 = vrot.lane.b32.xlu0 %v585, 32
    %v676 = vpop.permute.xlu0 %675
    %v677 = vsel %vm104, %v676, 0
    %679 = vmatpush.msra.mxu0 0.0
    %680 = vmatpush.msra.mxu0 0.0
    %681 = vmatpush.msra.mxu0 0.0
    %682 = vmatpush.msra.mxu0 0.0
    %683 = vmatpush.msra.mxu0 0.0
    %684 = vmatpush.msra.mxu0 0.0
    %685 = vmatpush.msra.mxu0 0.0
    %686 = vmatpush.msra.mxu0 0.0
    %687 = vmatpush.msra.mxu0 0.0
    %688 = vmatpush.msra.mxu0 0.0
    %689 = vmatpush.msra.mxu0 0.0
    %690 = vmatpush.msra.mxu0 0.0
    %691 = vmatpush.msra.mxu0 %v58
    %692 = vmatpush.msra.mxu0 %v57
    %693 = vmatpush.msra.mxu0 %v56
    %694 = vmatpush.msra.mxu0 %v55
    %695 = vmatmul.f32.gmra.mxu0 %v677
    %v696 = vpop.f32.mrf.mxu0
    %v697 = vadd.f32 0.0, %v696
    %698 = vdwg.mxu0
    %v699 = vadd.f32 %v651, %v697
    %v700 = vxor.u32 %v699, 2147483648
    %v701 = vmul.f32 %v700, 1.442695
    %v702 = vpow.pop %v701
    %v703 = vadd.f32 %v702, 1.0
    %v704 = vrcp.pop %v703
    %v705 = vmul.f32 %v703, %v704
    %v706 = vsub.f32 1.0, %v705
    %v707 = vmul.f32 %v704, %v706
    %v708 = vadd.f32 %v704, %v707
    %vm709 = vweird.f32 %v703
    %vm710 = vweird.f32 %v704
    %vm711 = vmor %vm709, %vm710
    %v712 = vsel %vm711, %v704, %v708
    %v713 = vand.u32 2147483647, %v703
    %vm714 = vcmp.eq.f32.partialorder %v713, 8.507059e+37
    %v715 = vand.u32 %v703, 2147483648
    %v716 = vor.u32 1.1754944e-38, %v715
    %v717 = vsel %vm714, %v716, %v712
    %v718 = vmul.f32 1.0, %v717
    %v719 = vmul.f32 %v718, 2.0
    %v720 = vsub.f32 %v719, 1.0
    %v721 = vmul.f32 %v718, %v579
    %723 = vrot.lane.b32.xlu0 %v720, 64
    %v724 = vpop.permute.xlu0 %723
    %v726 = vmul.f32 %v718, %v724
    %728 = vrot.lane.b32.xlu0 %v726, 32
    %v729 = vpop.permute.xlu0 %728
    %v731 = vadd.f32 %v721, %v729
    %v732 = vtanh.pop %v731
    %734 = vrot.lane.b32.xlu0 %v732, 64
    %v735 = vpop.permute.xlu0 %734
    %v737 = vmul.f32 %v718, %v735
    %v738 = vxor.u32 %v673, 2147483648
    %v739 = vmul.f32 %v738, 1.442695
    %v740 = vpow.pop %v739
    %v741 = vadd.f32 %v740, 1.0
    %v742 = vrcp.pop %v741
    %v743 = vmul.f32 %v741, %v742
    %v744 = vsub.f32 1.0, %v743
    %v745 = vmul.f32 %v742, %v744
    %v746 = vadd.f32 %v742, %v745
    %vm747 = vweird.f32 %v741
    %vm748 = vweird.f32 %v742
    %vm749 = vmor %vm747, %vm748
    %v750 = vsel %vm749, %v742, %v746
    %v751 = vand.u32 2147483647, %v741
    %vm752 = vcmp.eq.f32.partialorder %v751, 8.507059e+37
    %v753 = vand.u32 %v741, 2147483648
    %v754 = vor.u32 1.1754944e-38, %v753
    %v755 = vsel %vm752, %v754, %v750
    %v756 = vmul.f32 1.0, %v755
    %v757 = vmul.f32 %v756, 2.0
    %v758 = vsub.f32 %v757, 1.0
    %v760 = vrot.slane %v620, 6
    %v762 = vmul.f32 %v756, %v760
    %764 = vrot.lane.b32.xlu0 %v758, 64
    %v765 = vpop.permute.xlu0 %764
    %v767 = vmul.f32 %v756, %v765
    %769 = vrot.lane.b32.xlu0 %v767, 32
    %v770 = vpop.permute.xlu0 %769
    %v772 = vadd.f32 %v762, %v770
    %v773 = vtanh.pop %v772
    %775 = vrot.lane.b32.xlu0 %v773, 64
    %v776 = vpop.permute.xlu0 %775
    %v778 = vmul.f32 %v756, %v776
    %780 = vrot.lane.b32.xlu0 %v778, 32
    %v781 = vpop.permute.xlu0 %780
    %v782 = vsel %vm104, %v781, 0
    %784 = vmatpush.msra.mxu0 0.0
    %785 = vmatpush.msra.mxu0 0.0
    %786 = vmatpush.msra.mxu0 0.0
    %787 = vmatpush.msra.mxu0 0.0
    %788 = vmatpush.msra.mxu0 0.0
    %789 = vmatpush.msra.mxu0 0.0
    %790 = vmatpush.msra.mxu0 0.0
    %791 = vmatpush.msra.mxu0 0.0
    %792 = vmatpush.msra.mxu0 0.0
    %793 = vmatpush.msra.mxu0 0.0
    %794 = vmatpush.msra.mxu0 0.0
    %795 = vmatpush.msra.mxu0 0.0
    %796 = vmatpush.msra.mxu0 %v54
    %797 = vmatpush.msra.mxu0 %v53
    %798 = vmatpush.msra.mxu0 %v52
    %799 = vmatpush.msra.mxu0 %v51
    %800 = vmatmul.f32.gmra.mxu0 %v782
    %v801 = vpop.f32.mrf.mxu0
    %v802 = vadd.f32 %v167, %v801
    %803 = vdwg.mxu0
    %804 = vmatpush.msra.mxu0 0.0
    %805 = vmatpush.msra.mxu0 0.0
    %806 = vmatpush.msra.mxu0 0.0
    %807 = vmatpush.msra.mxu0 0.0
    %808 = vmatpush.msra.mxu0 0.0
    %809 = vmatpush.msra.mxu0 0.0
    %810 = vmatpush.msra.mxu0 0.0
    %811 = vmatpush.msra.mxu0 0.0
    %812 = vmatpush.msra.mxu0 0.0
    %813 = vmatpush.msra.mxu0 0.0
    %814 = vmatpush.msra.mxu0 0.0
    %815 = vmatpush.msra.mxu0 0.0
    %816 = vmatpush.msra.mxu0 %v50
    %817 = vmatpush.msra.mxu0 %v49
    %818 = vmatpush.msra.mxu0 %v48
    %819 = vmatpush.msra.mxu0 %v47
    %820 = vmatmul.f32.gmra.mxu0 %v782
    %v821 = vpop.f32.mrf.mxu0
    %v822 = vadd.f32 0.0, %v821
    %823 = vdwg.mxu0
    %v825 = vrot.slane %v822, 6
    %v827 = vadd.f32 %v102, %v825
    %829 = vrot.lane.b32.xlu0 %v737, 32
    %v830 = vpop.permute.xlu0 %829
    %v831 = vsel %vm104, %v830, 0
    %833 = vmatpush.msra.mxu0 0.0
    %834 = vmatpush.msra.mxu0 0.0
    %835 = vmatpush.msra.mxu0 0.0
    %836 = vmatpush.msra.mxu0 0.0
    %837 = vmatpush.msra.mxu0 0.0
    %838 = vmatpush.msra.mxu0 0.0
    %839 = vmatpush.msra.mxu0 0.0
    %840 = vmatpush.msra.mxu0 0.0
    %841 = vmatpush.msra.mxu0 0.0
    %842 = vmatpush.msra.mxu0 0.0
    %843 = vmatpush.msra.mxu0 0.0
    %844 = vmatpush.msra.mxu0 0.0
    %845 = vmatpush.msra.mxu0 %v58
    %846 = vmatpush.msra.mxu0 %v57
    %847 = vmatpush.msra.mxu0 %v56
    %848 = vmatpush.msra.mxu0 %v55
    %849 = vmatmul.f32.gmra.mxu0 %v831
    %v850 = vpop.f32.mrf.mxu0
    %v851 = vadd.f32 0.0, %v850
    %852 = vdwg.mxu0
    %v853 = vadd.f32 %v802, %v851
    %v854 = vxor.u32 %v853, 2147483648
    %v855 = vmul.f32 %v854, 1.442695
    %v856 = vpow.pop %v855
    %v857 = vadd.f32 %v856, 1.0
    %v858 = vrcp.pop %v857
    %v859 = vmul.f32 %v857, %v858
    %v860 = vsub.f32 1.0, %v859
    %v861 = vmul.f32 %v858, %v860
    %v862 = vadd.f32 %v858, %v861
    %vm863 = vweird.f32 %v857
    %vm864 = vweird.f32 %v858
    %vm865 = vmor %vm863, %vm864
    %v866 = vsel %vm865, %v858, %v862
    %v867 = vand.u32 2147483647, %v857
    %vm868 = vcmp.eq.f32.partialorder %v867, 8.507059e+37
    %v869 = vand.u32 %v857, 2147483648
    %v870 = vor.u32 1.1754944e-38, %v869
    %v871 = vsel %vm868, %v870, %v866
    %v872 = vmul.f32 1.0, %v871
    %v873 = vmul.f32 %v872, 2.0
    %v874 = vsub.f32 %v873, 1.0
    %v875 = vmul.f32 %v872, %v731
    %877 = vrot.lane.b32.xlu0 %v874, 64
    %v878 = vpop.permute.xlu0 %877
    %v880 = vmul.f32 %v872, %v878
    %882 = vrot.lane.b32.xlu0 %v880, 32
    %v883 = vpop.permute.xlu0 %882
    %v885 = vadd.f32 %v875, %v883
    %v886 = vtanh.pop %v885
    %888 = vrot.lane.b32.xlu0 %v886, 64
    %v889 = vpop.permute.xlu0 %888
    %v891 = vmul.f32 %v872, %v889
    %v892 = vxor.u32 %v827, 2147483648
    %v893 = vmul.f32 %v892, 1.442695
    %v894 = vpow.pop %v893
    %v895 = vadd.f32 %v894, 1.0
    %v896 = vrcp.pop %v895
    %v897 = vmul.f32 %v895, %v896
    %v898 = vsub.f32 1.0, %v897
    %v899 = vmul.f32 %v896, %v898
    %v900 = vadd.f32 %v896, %v899
    %vm901 = vweird.f32 %v895
    %vm902 = vweird.f32 %v896
    %vm903 = vmor %vm901, %vm902
    %v904 = vsel %vm903, %v896, %v900
    %v905 = vand.u32 2147483647, %v895
    %vm906 = vcmp.eq.f32.partialorder %v905, 8.507059e+37
    %v907 = vand.u32 %v895, 2147483648
    %v908 = vor.u32 1.1754944e-38, %v907
    %v909 = vsel %vm906, %v908, %v904
    %v910 = vmul.f32 1.0, %v909
    %v911 = vmul.f32 %v910, 2.0
    %v912 = vsub.f32 %v911, 1.0
    %v914 = vrot.slane %v772, 6
    %v916 = vmul.f32 %v910, %v914
    %918 = vrot.lane.b32.xlu0 %v912, 64
    %v919 = vpop.permute.xlu0 %918
    %v921 = vmul.f32 %v910, %v919
    %923 = vrot.lane.b32.xlu0 %v921, 32
    %v924 = vpop.permute.xlu0 %923
    %v926 = vadd.f32 %v916, %v924
    %v927 = vtanh.pop %v926
    %929 = vrot.lane.b32.xlu0 %v927, 64
    %v930 = vpop.permute.xlu0 %929
    %v932 = vmul.f32 %v910, %v930
    %v934 = vrot.slane %v932, 2
    %935 = vrot.lane.b32.xlu0 %v934, 32
    %v936 = vpop.permute.xlu0 %935
    %v937 = vsel %vm104, %v936, 0
    %939 = vmatpush.msra.mxu0 0.0
    %940 = vmatpush.msra.mxu0 0.0
    %941 = vmatpush.msra.mxu0 0.0
    %942 = vmatpush.msra.mxu0 0.0
    %943 = vmatpush.msra.mxu0 0.0
    %944 = vmatpush.msra.mxu0 0.0
    %945 = vmatpush.msra.mxu0 0.0
    %946 = vmatpush.msra.mxu0 0.0
    %947 = vmatpush.msra.mxu0 0.0
    %948 = vmatpush.msra.mxu0 0.0
    %949 = vmatpush.msra.mxu0 0.0
    %950 = vmatpush.msra.mxu0 0.0
    %951 = vmatpush.msra.mxu0 %v54
    %952 = vmatpush.msra.mxu0 %v53
    %953 = vmatpush.msra.mxu0 %v52
    %954 = vmatpush.msra.mxu0 %v51
    %955 = vmatmul.f32.gmra.mxu0 %v937
    %v956 = vpop.f32.mrf.mxu0
    %v957 = vadd.f32 %v167, %v956
    %958 = vdwg.mxu0
    %959 = vmatpush.msra.mxu0 0.0
    %960 = vmatpush.msra.mxu0 0.0
    %961 = vmatpush.msra.mxu0 0.0
    %962 = vmatpush.msra.mxu0 0.0
    %963 = vmatpush.msra.mxu0 0.0
    %964 = vmatpush.msra.mxu0 0.0
    %965 = vmatpush.msra.mxu0 0.0
    %966 = vmatpush.msra.mxu0 0.0
    %967 = vmatpush.msra.mxu0 0.0
    %968 = vmatpush.msra.mxu0 0.0
    %969 = vmatpush.msra.mxu0 0.0
    %970 = vmatpush.msra.mxu0 0.0
    %971 = vmatpush.msra.mxu0 %v50
    %972 = vmatpush.msra.mxu0 %v49
    %973 = vmatpush.msra.mxu0 %v48
    %974 = vmatpush.msra.mxu0 %v47
    %975 = vmatmul.f32.gmra.mxu0 %v937
    %v976 = vpop.f32.mrf.mxu0
    %v977 = vadd.f32 0.0, %v976
    %978 = vdwg.mxu0
    %v980 = vrot.slane %v977, 4
    %v982 = vadd.f32 %v102, %v980
    %984 = vrot.lane.b32.xlu0 %v891, 32
    %v985 = vpop.permute.xlu0 %984
    %v986 = vsel %vm104, %v985, 0
    %988 = vmatpush.msra.mxu0 0.0
    %989 = vmatpush.msra.mxu0 0.0
    %990 = vmatpush.msra.mxu0 0.0
    %991 = vmatpush.msra.mxu0 0.0
    %992 = vmatpush.msra.mxu0 0.0
    %993 = vmatpush.msra.mxu0 0.0
    %994 = vmatpush.msra.mxu0 0.0
    %995 = vmatpush.msra.mxu0 0.0
    %996 = vmatpush.msra.mxu0 0.0
    %997 = vmatpush.msra.mxu0 0.0
    %998 = vmatpush.msra.mxu0 0.0
    %999 = vmatpush.msra.mxu0 0.0
    %1000 = vmatpush.msra.mxu0 %v58
    %1001 = vmatpush.msra.mxu0 %v57
    %1002 = vmatpush.msra.mxu0 %v56
    %1003 = vmatpush.msra.mxu0 %v55
    %1004 = vmatmul.f32.gmra.mxu0 %v986
    %v1005 = vpop.f32.mrf.mxu0
    %v1006 = vadd.f32 0.0, %v1005
    %1007 = vdwg.mxu0
    %v1008 = vadd.f32 %v957, %v1006
    %v1009 = vxor.u32 %v1008, 2147483648
    %v1010 = vmul.f32 %v1009, 1.442695
    %v1011 = vpow.pop %v1010
    %v1012 = vadd.f32 %v1011, 1.0
    %v1013 = vrcp.pop %v1012
    %v1014 = vmul.f32 %v1012, %v1013
    %v1015 = vsub.f32 1.0, %v1014
    %v1016 = vmul.f32 %v1013, %v1015
    %v1017 = vadd.f32 %v1013, %v1016
    %vm1018 = vweird.f32 %v1012
    %vm1019 = vweird.f32 %v1013
    %vm1020 = vmor %vm1018, %vm1019
    %v1021 = vsel %vm1020, %v1013, %v1017
    %v1022 = vand.u32 2147483647, %v1012
    %vm1023 = vcmp.eq.f32.partialorder %v1022, 8.507059e+37
    %v1024 = vand.u32 %v1012, 2147483648
    %v1025 = vor.u32 1.1754944e-38, %v1024
    %v1026 = vsel %vm1023, %v1025, %v1021
    %v1027 = vmul.f32 1.0, %v1026
    %v1028 = vmul.f32 %v1027, 2.0
    %v1029 = vsub.f32 %v1028, 1.0
    %v1030 = vmul.f32 %v1027, %v885
    %1032 = vrot.lane.b32.xlu0 %v1029, 64
    %v1033 = vpop.permute.xlu0 %1032
    %v1035 = vmul.f32 %v1027, %v1033
    %1037 = vrot.lane.b32.xlu0 %v1035, 32
    %v1038 = vpop.permute.xlu0 %1037
    %v1040 = vadd.f32 %v1030, %v1038
    %v1041 = vtanh.pop %v1040
    %1043 = vrot.lane.b32.xlu0 %v1041, 64
    %v1044 = vpop.permute.xlu0 %1043
    %v1046 = vmul.f32 %v1027, %v1044
    %v1047 = vxor.u32 %v982, 2147483648
    %v1048 = vmul.f32 %v1047, 1.442695
    %v1049 = vpow.pop %v1048
    %v1050 = vadd.f32 %v1049, 1.0
    %v1051 = vrcp.pop %v1050
    %v1052 = vmul.f32 %v1050, %v1051
    %v1053 = vsub.f32 1.0, %v1052
    %v1054 = vmul.f32 %v1051, %v1053
    %v1055 = vadd.f32 %v1051, %v1054
    %vm1056 = vweird.f32 %v1050
    %vm1057 = vweird.f32 %v1051
    %vm1058 = vmor %vm1056, %vm1057
    %v1059 = vsel %vm1058, %v1051, %v1055
    %v1060 = vand.u32 2147483647, %v1050
    %vm1061 = vcmp.eq.f32.partialorder %v1060, 8.507059e+37
    %v1062 = vand.u32 %v1050, 2147483648
    %v1063 = vor.u32 1.1754944e-38, %v1062
    %v1064 = vsel %vm1061, %v1063, %v1059
    %v1065 = vmul.f32 1.0, %v1064
    %v1066 = vmul.f32 %v1065, 2.0
    %v1067 = vsub.f32 %v1066, 1.0
    %v1069 = vrot.slane %v926, 6
    %v1071 = vmul.f32 %v1065, %v1069
    %1073 = vrot.lane.b32.xlu0 %v1067, 64
    %v1074 = vpop.permute.xlu0 %1073
    %v1076 = vmul.f32 %v1065, %v1074
    %1078 = vrot.lane.b32.xlu0 %v1076, 32
    %v1079 = vpop.permute.xlu0 %1078
    %v1081 = vadd.f32 %v1071, %v1079
    %v1082 = vtanh.pop %v1081
    %1084 = vrot.lane.b32.xlu0 %v1082, 64
    %v1085 = vpop.permute.xlu0 %1084
    %v1087 = vmul.f32 %v1065, %v1085
    %v1089 = vrot.slane %v1087, 4
    %1090 = vrot.lane.b32.xlu0 %v1089, 32
    %v1091 = vpop.permute.xlu0 %1090
    %v1092 = vsel %vm104, %v1091, 0
    %1094 = vmatpush.msra.mxu0 0.0
    %1095 = vmatpush.msra.mxu0 0.0
    %1096 = vmatpush.msra.mxu0 0.0
    %1097 = vmatpush.msra.mxu0 0.0
    %1098 = vmatpush.msra.mxu0 0.0
    %1099 = vmatpush.msra.mxu0 0.0
    %1100 = vmatpush.msra.mxu0 0.0
    %1101 = vmatpush.msra.mxu0 0.0
    %1102 = vmatpush.msra.mxu0 0.0
    %1103 = vmatpush.msra.mxu0 0.0
    %1104 = vmatpush.msra.mxu0 0.0
    %1105 = vmatpush.msra.mxu0 0.0
    %1106 = vmatpush.msra.mxu0 %v54
    %1107 = vmatpush.msra.mxu0 %v53
    %1108 = vmatpush.msra.mxu0 %v52
    %1109 = vmatpush.msra.mxu0 %v51
    %1110 = vmatmul.f32.gmra.mxu0 %v1092
    %v1111 = vpop.f32.mrf.mxu0
    %v1112 = vadd.f32 %v167, %v1111
    %1113 = vdwg.mxu0
    %1114 = vmatpush.msra.mxu0 0.0
    %1115 = vmatpush.msra.mxu0 0.0
    %1116 = vmatpush.msra.mxu0 0.0
    %1117 = vmatpush.msra.mxu0 0.0
    %1118 = vmatpush.msra.mxu0 0.0
    %1119 = vmatpush.msra.mxu0 0.0
    %1120 = vmatpush.msra.mxu0 0.0
    %1121 = vmatpush.msra.mxu0 0.0
    %1122 = vmatpush.msra.mxu0 0.0
    %1123 = vmatpush.msra.mxu0 0.0
    %1124 = vmatpush.msra.mxu0 0.0
    %1125 = vmatpush.msra.mxu0 0.0
    %1126 = vmatpush.msra.mxu0 %v50
    %1127 = vmatpush.msra.mxu0 %v49
    %1128 = vmatpush.msra.mxu0 %v48
    %1129 = vmatpush.msra.mxu0 %v47
    %1130 = vmatmul.f32.gmra.mxu0 %v1092
    %v1131 = vpop.f32.mrf.mxu0
    %v1132 = vadd.f32 0.0, %v1131
    %1133 = vdwg.mxu0
    %v1135 = vrot.slane %v1132, 2
    %v1137 = vadd.f32 %v102, %v1135
    %1139 = vrot.lane.b32.xlu0 %v1046, 32
    %v1140 = vpop.permute.xlu0 %1139
    %v1141 = vsel %vm104, %v1140, 0
    %1143 = vmatpush.msra.mxu0 0.0
    %1144 = vmatpush.msra.mxu0 0.0
    %1145 = vmatpush.msra.mxu0 0.0
    %1146 = vmatpush.msra.mxu0 0.0
    %1147 = vmatpush.msra.mxu0 0.0
    %1148 = vmatpush.msra.mxu0 0.0
    %1149 = vmatpush.msra.mxu0 0.0
    %1150 = vmatpush.msra.mxu0 0.0
    %1151 = vmatpush.msra.mxu0 0.0
    %1152 = vmatpush.msra.mxu0 0.0
    %1153 = vmatpush.msra.mxu0 0.0
    %1154 = vmatpush.msra.mxu0 0.0
    %1155 = vmatpush.msra.mxu0 %v58
    %1156 = vmatpush.msra.mxu0 %v57
    %1157 = vmatpush.msra.mxu0 %v56
    %1158 = vmatpush.msra.mxu0 %v55
    %1159 = vmatmul.f32.gmra.mxu0 %v1141
    %v1160 = vpop.f32.mrf.mxu0
    %v1161 = vadd.f32 0.0, %v1160
    %1162 = vdwg.mxu0
    %v1163 = vadd.f32 %v1112, %v1161
    %v1164 = vxor.u32 %v1163, 2147483648
    %v1165 = vmul.f32 %v1164, 1.442695
    %v1166 = vpow.pop %v1165
    %v1167 = vadd.f32 %v1166, 1.0
    %v1168 = vrcp.pop %v1167
    %v1169 = vmul.f32 %v1167, %v1168
    %v1170 = vsub.f32 1.0, %v1169
    %v1171 = vmul.f32 %v1168, %v1170
    %v1172 = vadd.f32 %v1168, %v1171
    %vm1173 = vweird.f32 %v1167
    %vm1174 = vweird.f32 %v1168
    %vm1175 = vmor %vm1173, %vm1174
    %v1176 = vsel %vm1175, %v1168, %v1172
    %v1177 = vand.u32 2147483647, %v1167
    %vm1178 = vcmp.eq.f32.partialorder %v1177, 8.507059e+37
    %v1179 = vand.u32 %v1167, 2147483648
    %v1180 = vor.u32 1.1754944e-38, %v1179
    %v1181 = vsel %vm1178, %v1180, %v1176
    %v1182 = vmul.f32 1.0, %v1181
    %v1183 = vmul.f32 %v1182, 2.0
    %v1184 = vsub.f32 %v1183, 1.0
    %v1185 = vmul.f32 %v1182, %v1040
    %1187 = vrot.lane.b32.xlu0 %v1184, 64
    %v1188 = vpop.permute.xlu0 %1187
    %v1190 = vmul.f32 %v1182, %v1188
    %1192 = vrot.lane.b32.xlu0 %v1190, 32
    %v1193 = vpop.permute.xlu0 %1192
    %v1195 = vadd.f32 %v1185, %v1193
    %v1196 = vtanh.pop %v1195
    %1198 = vrot.lane.b32.xlu0 %v1196, 64
    %v1199 = vpop.permute.xlu0 %1198
    %v1201 = vmul.f32 %v1182, %v1199
    %v1202 = vxor.u32 %v1137, 2147483648
    %v1203 = vmul.f32 %v1202, 1.442695
    %v1204 = vpow.pop %v1203
    %v1205 = vadd.f32 %v1204, 1.0
    %v1206 = vrcp.pop %v1205
    %v1207 = vmul.f32 %v1205, %v1206
    %v1208 = vsub.f32 1.0, %v1207
    %v1209 = vmul.f32 %v1206, %v1208
    %v1210 = vadd.f32 %v1206, %v1209
    %vm1211 = vweird.f32 %v1205
    %vm1212 = vweird.f32 %v1206
    %vm1213 = vmor %vm1211, %vm1212
    %v1214 = vsel %vm1213, %v1206, %v1210
    %v1215 = vand.u32 2147483647, %v1205
    %vm1216 = vcmp.eq.f32.partialorder %v1215, 8.507059e+37
    %v1217 = vand.u32 %v1205, 2147483648
    %v1218 = vor.u32 1.1754944e-38, %v1217
    %v1219 = vsel %vm1216, %v1218, %v1214
    %v1220 = vmul.f32 1.0, %v1219
    %v1221 = vmul.f32 %v1220, 2.0
    %v1222 = vsub.f32 %v1221, 1.0
    %v1224 = vrot.slane %v1081, 6
    %v1226 = vmul.f32 %v1220, %v1224
    %1228 = vrot.lane.b32.xlu0 %v1222, 64
    %v1229 = vpop.permute.xlu0 %1228
    %v1231 = vmul.f32 %v1220, %v1229
    %1233 = vrot.lane.b32.xlu0 %v1231, 32
    %v1234 = vpop.permute.xlu0 %1233
    %v1236 = vadd.f32 %v1226, %v1234
    %v1237 = vtanh.pop %v1236
    %1239 = vrot.lane.b32.xlu0 %v1237, 64
    %v1240 = vpop.permute.xlu0 %1239
    %v1242 = vmul.f32 %v1220, %v1240
    %v1244 = vrot.slane %v1242, 6
    %1245 = vrot.lane.b32.xlu0 %v1244, 32
    %v1246 = vpop.permute.xlu0 %1245
    %v1247 = vsel %vm104, %v1246, 0
    %1249 = vmatpush.msra.mxu0 0.0
    %1250 = vmatpush.msra.mxu0 0.0
    %1251 = vmatpush.msra.mxu0 0.0
    %1252 = vmatpush.msra.mxu0 0.0
    %1253 = vmatpush.msra.mxu0 0.0
    %1254 = vmatpush.msra.mxu0 0.0
    %1255 = vmatpush.msra.mxu0 0.0
    %1256 = vmatpush.msra.mxu0 0.0
    %1257 = vmatpush.msra.mxu0 0.0
    %1258 = vmatpush.msra.mxu0 0.0
    %1259 = vmatpush.msra.mxu0 0.0
    %1260 = vmatpush.msra.mxu0 0.0
    %1261 = vmatpush.msra.mxu0 %v54
    %1262 = vmatpush.msra.mxu0 %v53
    %1263 = vmatpush.msra.mxu0 %v52
    %1264 = vmatpush.msra.mxu0 %v51
    %1265 = vmatmul.f32.gmra.mxu0 %v1247
    %v1266 = vpop.f32.mrf.mxu0
    %v1267 = vadd.f32 %v167, %v1266
    %1268 = vdwg.mxu0
    %1270 = vrot.lane.b32.xlu0 %v1201, 32
    %v1271 = vpop.permute.xlu0 %1270
    %v1272 = vsel %vm104, %v1271, 0
    %1274 = vmatpush.msra.mxu0 0.0
    %1275 = vmatpush.msra.mxu0 0.0
    %1276 = vmatpush.msra.mxu0 0.0
    %1277 = vmatpush.msra.mxu0 0.0
    %1278 = vmatpush.msra.mxu0 0.0
    %1279 = vmatpush.msra.mxu0 0.0
    %1280 = vmatpush.msra.mxu0 0.0
    %1281 = vmatpush.msra.mxu0 0.0
    %1282 = vmatpush.msra.mxu0 0.0
    %1283 = vmatpush.msra.mxu0 0.0
    %1284 = vmatpush.msra.mxu0 0.0
    %1285 = vmatpush.msra.mxu0 0.0
    %1286 = vmatpush.msra.mxu0 %v58
    %1287 = vmatpush.msra.mxu0 %v57
    %1288 = vmatpush.msra.mxu0 %v56
    %1289 = vmatpush.msra.mxu0 %v55
    %1290 = vmatmul.f32.gmra.mxu0 %v1272
    %v1291 = vpop.f32.mrf.mxu0
    %v1292 = vadd.f32 0.0, %v1291
    %1293 = vdwg.mxu0
    %v1294 = vadd.f32 %v1267, %v1292
    %v1295 = vxor.u32 %v1294, 2147483648
    %v1296 = vmul.f32 %v1295, 1.442695
    %v1297 = vpow.pop %v1296
    %v1298 = vadd.f32 %v1297, 1.0
    %v1299 = vrcp.pop %v1298
    %v1300 = vmul.f32 %v1298, %v1299
    %v1301 = vsub.f32 1.0, %v1300
    %v1302 = vmul.f32 %v1299, %v1301
    %v1303 = vadd.f32 %v1299, %v1302
    %vm1304 = vweird.f32 %v1298
    %vm1305 = vweird.f32 %v1299
    %vm1306 = vmor %vm1304, %vm1305
    %v1307 = vsel %vm1306, %v1299, %v1303
    %v1308 = vand.u32 2147483647, %v1298
    %vm1309 = vcmp.eq.f32.partialorder %v1308, 8.507059e+37
    %v1310 = vand.u32 %v1298, 2147483648
    %v1311 = vor.u32 1.1754944e-38, %v1310
    %v1312 = vsel %vm1309, %v1311, %v1307
    %v1313 = vmul.f32 1.0, %v1312
    %v1314 = vmul.f32 %v1313, 2.0
    %v1315 = vsub.f32 %v1314, 1.0
    %v1316 = vmul.f32 %v1313, %v1195
    %1318 = vrot.lane.b32.xlu0 %v1315, 64
    %v1319 = vpop.permute.xlu0 %1318
    %v1321 = vmul.f32 %v1313, %v1319
    %1323 = vrot.lane.b32.xlu0 %v1321, 32
    %v1324 = vpop.permute.xlu0 %1323
    %v1326 = vadd.f32 %v1316, %v1324
    %v1327 = vtanh.pop %v1326
    %1329 = vrot.lane.b32.xlu0 %v1327, 64
    %v1330 = vpop.permute.xlu0 %1329
    %v1332 = vmul.f32 %v1313, %v1330
    %v1333 = vrot.slane %v430, 6
    %v1335 = vrot.slane %v585, 4
    %v1337 = vrot.slane %v737, 2
    %v1339 = vrot.slane %v1046, 6
    %v1341 = vrot.slane %v1201, 4
    %v1344 = vrot.slane %v1332, 2
    %vm1346 = vcmask 1041408
    %v1347 = vsel %vm1346, %v275, %v1333
    %vm1348 = vcmask 1043456
    %v1349 = vsel %vm1348, %v1347, %v1335
    %vm1350 = vcmask 1045504
    %v1351 = vsel %vm1350, %v1349, %v1337
    %v1352 = vsel %vm1346, %v891, %v1339
    %v1353 = vsel %vm1348, %v1352, %v1341
    %v1354 = vsel %vm1350, %v1353, %v1344
    %v1355 = vperm.slane %v64, 0
    %1358 = vrot.lane.b32.xlu0 %v1351, 32
    %v1359 = vpop.permute.xlu0 %1358
    %1360 = vrot.lane.b32.xlu0 %v1354, 32
    %v1361 = vpop.permute.xlu0 %1360
    %v1362 = vsel %vm104, %v1359, 0
    %v1364 = vsel %vm104, %v1361, 0
    %1366 = vmatpush.msra.mxu0 0.0
    %1367 = vmatpush.msra.mxu0 0.0
    %1368 = vmatpush.msra.mxu0 0.0
    %1369 = vmatpush.msra.mxu0 0.0
    %1370 = vmatpush.msra.mxu0 0.0
    %1371 = vmatpush.msra.mxu0 0.0
    %1372 = vmatpush.msra.mxu0 0.0
    %1373 = vmatpush.msra.mxu0 0.0
    %1374 = vmatpush.msra.mxu0 0.0
    %1375 = vmatpush.msra.mxu0 0.0
    %1376 = vmatpush.msra.mxu0 0.0
    %1377 = vmatpush.msra.mxu0 0.0
    %1378 = vmatpush.msra.mxu0 %v62
    %1379 = vmatpush.msra.mxu0 %v61
    %1380 = vmatpush.msra.mxu0 %v60
    %1381 = vmatpush.msra.mxu0 %v59
    %1382 = vmatmul.f32.gmra.mxu0 %v1362
    %v1383 = vpop.f32.mrf.mxu0
    %v1384 = vadd.f32 %v1355, %v1383
    %1385 = vmatmul.f32.gmra.mxu0 %v1364
    %v1386 = vpop.f32.mrf.mxu0
    %v1387 = vadd.f32 %v1355, %v1386
    %1388 = vdwg.mxu0
    %1389 = vmax.xlane.f32.xlu0 %v1384
    %v1390 = vpop.xlane.xlu0 %1389
    %1391 = vmax.xlane.f32.xlu0 %v1387
    %v1392 = vpop.xlane.xlu0 %1391
    %v1393 = vsub.f32 %v1384, %v1390
    %v1394 = vsub.f32 %v1387, %v1392
    %v1395 = vmul.f32 %v1393, 1.442695
    %v1396 = vpow.pop %v1395
    %v1397 = vmul.f32 %v1394, 1.442695
    %v1398 = vpow.pop %v1397
    %1399 = vadd.xlane.f32.xlu0 %v1396
    %v1400 = vpop.xlane.xlu0 %1399
    %1401 = vadd.xlane.f32.xlu0 %v1398
    %v1402 = vpop.xlane.xlu0 %1401
    %v1403 = vlog2.pop %v1400
    %v1404 = vmul.f32 %v1403, 0.6931472
    %v1405 = vlog2.pop %v1402
    %v1406 = vmul.f32 %v1405, 0.6931472
    %v1407 = vadd.f32 %v1390, %v1404
    %v1408 = vadd.f32 %v1392, %v1406
    %1409 = vset.pattern.permute.xlu0 1
    %1410 = vperm.xlu0 %1409, %v65
    %v1411 = vpop.permute.xlu0 %1410
    %1412 = vset.pattern.permute.xlu0 1
    %1413 = vperm.xlu0 %1412, %v66
    %v1414 = vpop.permute.xlu0 %1413
    %vm1415 = vcmp.eq.s32.totalorder %v68, %v1411
    %vm1416 = vcmp.eq.s32.totalorder %v68, %v1414
    %v1417 = vsel %vm1415, %v1384, 0.0
    %v1418 = vsel %vm1416, %v1387, 0.0
    %1419 = vadd.xlane.f32.xlu0 %v1417
    %v1420 = vpop.xlane.xlu0 %1419
    %1421 = vadd.xlane.f32.xlu0 %v1418
    %v1422 = vpop.xlane.xlu0 %1421
    %v1423 = vsub.f32 %v1420, %v1407
    %v1424 = vsub.f32 %v1422, %v1408
    %v1425 = vlaneseq
    %v1426 = vshrl.u32 %v1425, 7
    %v1427 = vadd.s32 %v1426, 8
    %vm1428 = vcmp.lt.s32.totalorder %v1426, 0
    %v1429 = vsub.s32 0, %v1426
    %v1430 = vsel %vm1428, %v1429, %v1426
    %v1431 = vshrl.u32 %v1430, 1
    %v1432 = vand.u32 %v1430, 1
    %v1433 = vsub.s32 0, %v1432
    %v1434 = vsel %vm1428, %v1433, %v1432
    %vm1435 = vcmp.lt.s32.totalorder %v1427, 0
    %v1436 = vsub.s32 0, %v1427
    %v1437 = vsel %vm1435, %v1436, %v1427
    %v1438 = vshrl.u32 %v1437, 1
    %v1439 = vand.u32 %v1437, 1
    %v1440 = vsub.s32 0, %v1439
    %v1441 = vsel %vm1435, %v1440, %v1439
    %vm1442 = vcmp.ne.s32.totalorder %v1434, 0
    %vm1443 = vcmp.ne.s32.totalorder %v1441, 0
    %vm1444 = vcmp.lt.s32.totalorder %v1434, 0
    %vm1445 = vcmp.lt.s32.totalorder %v1441, 0
    %vm1446 = vmand %vm1444, %vm1442
    %vm1447 = vmand %vm1445, %vm1443
    %v1448 = vadd.s32 %v1434, 2
    %v1449 = vadd.s32 %v1441, 2
    %v1450 = vsel %vm1446, %v1448, %v1434
    %v1451 = vsel %vm1447, %v1449, %v1441
    %vm1452 = vcmp.eq.s32.totalorder %v1450, %v68
    %vm1453 = vcmp.eq.s32.totalorder %v1451, %v68
    %v1454 = vsel %vm1452, 1, 0
    %v1455 = vsel %vm1453, 1, 0
    %v1456 = vcvt.s32.f32 %v1454
    %v1457 = vcvt.s32.f32 %v1455
    %v1458 = vmul.f32 %v1423, %v1456
    %v1459 = vmul.f32 %v1424, %v1457
    %vm1460 = vcmask 15360
    %v1461 = vsel %vm1460, %v1458, 0.0
    %v1462 = vsel %vm1460, %v1459, 0.0
    %v1463 = vadd.f32 %v1461, %v1462
    %v1464 = vrot.slane %v1463, 4
    %v1465 = vadd.f32 %v1463, %v1464
    %v1466 = vrot.slane %v1465, 2
    %v1467 = vadd.f32 %v1465, %v1466
    %v1468 = vrot.slane %v1467, 1
    %v1469 = vadd.f32 %v1467, %v1468
    %vm1470 = vcmask 8192
    %1471 = vst.msk [vmem:[#allocation5] sm:$0x1] %vm1470, %v1469
    // Predicated region
    $region18: #{rnnlm_forward.1} parent=1 // pred_check
      _
    $region19: #{rnnlm_forward.1} parent=1 // pred_check_branch
      %1473 = sbr.rel (0) target = $region21
    $region20: #{rnnlm_forward.1} parent=1 // pred_region
      %1475 = vsyncadd [#allocation4], 0
      %s1477 = sshll.u32 [#allocation5], 4
      %s1478 = int_to_ptr.vmem [resolvable:$true] %s1477
      %s1479 = sshll.u32 %s3, 4
      %s1480 = int_to_ptr.hbm [resolvable:$true] %s1479
      %1482 = dma.vmem_to_hbm [thread:$0]  %s1478, 16, %s1480, [#allocation4]
    $region21: #{rnnlm_forward.1} parent=1 // pred_fallthru
      _
    // Predicated region
    $region22: #{rnnlm_forward.1} parent=1 // pred_check
      _
    $region23: #{rnnlm_forward.1} parent=1 // pred_check_branch
      %1484 = sbr.rel (0) target = $region25
    $region24: #{rnnlm_forward.1} parent=1 // pred_region
      %1486 = dma.done [#allocation4], 16
    $region25: #{rnnlm_forward.1} parent=1 // pred_fallthru
      _
    %1487 = vsyncpa [#allocation3], 1
    %1488 = vsyncpa [#allocation4], 1

</llo_original>
